<compile_context>
chip_gen: v5e
topology: v5e:2x2
jax: 0.10.0
libtpu: 0.0.40
codegen_flags: <defaults>
</compile_context>

<pallas_src>
import functools

import jax
import jax.numpy as jnp
from jax import lax
from jax.experimental import pallas as pl
from jax.experimental.pallas import tpu as pltpu


# -----------------------------  Pallas kernel  ------------------------------

def _dense_unit_kernel(feat_ref, s1_ref, b1_ref, w1_ref, b2_ref, w2_ref,
                       out_ref, mid_ref, *, H, W, cmid, growth):
    """One fused DenseNet bottleneck unit for one image.

    feat_ref: (1, H*W, C_total) f32  all block features (unwritten tail
                                     channels are zero; their params are
                                     zero-padded so they contribute nothing)
    s1_ref:   (1, C_total) f32       folded BN1 scale (zero padded)
    b1_ref:   (1, C_total) f32       folded BN1 shift (zero padded)
    w1_ref:   (C_total, cmid) bf16   1x1 conv weights, BN2 scale folded in
    b2_ref:   (1, cmid) f32          folded BN2 shift
    w2_ref:   (9, cmid, growth) bf16 3x3 conv weights, tap-major (dy*3+dx)
    out_ref:  (1, H*W, growth)
    mid_ref:  (H+2, W+2, cmid) f32   VMEM scratch with a zero 1-pixel halo
    """
    # Zero the scratch (including the halo) once; the interior is rewritten
    # every grid step, the halo stays zero and implements SAME padding.
    @pl.when(pl.program_id(0) == 0)
    def _():
        mid_ref[...] = jnp.zeros_like(mid_ref)

    # ---- BN1 -> ReLU -> 1x1 conv (bf16 MXU, f32 acc) -> BN2 shift -> ReLU --
    x = feat_ref[0].astype(jnp.float32)                       # (HW, C_total)
    h = jnp.maximum(x * s1_ref[...] + b1_ref[...], 0.0)       # f32 VPU
    y = jnp.dot(h.astype(jnp.bfloat16), w1_ref[...],
                preferred_element_type=jnp.float32)           # (HW, cmid)
    mid = jnp.maximum(y + b2_ref[...], 0.0)                   # BN2 scale folded
    mid_ref[1:H + 1, 1:W + 1, :] = mid.reshape(H, W, cmid)

    # ---- 3x3 conv (padding=1) as 9 shifted-tap matmuls, f32 accumulation ---
    acc = jnp.zeros((H * W, growth), jnp.float32)
    for t in range(9):                                        # static unroll
        dy, dx = divmod(t, 3)
        tap = mid_ref[dy:dy + H, dx:dx + W, :].reshape(H * W, cmid)
        acc = acc + jnp.dot(tap.astype(jnp.bfloat16), w2_ref[t],
                            preferred_element_type=jnp.float32)
    # NOTE: growth (< 128) on the lane axis -> masked output stores; output
    # volume is small relative to the fused compute, so this is acceptable.
    out_ref[0] = acc.astype(out_ref.dtype)


def _make_dense_unit_call(N, H, W, c_total, cmid, growth, out_dtype):
    kernel = functools.partial(_dense_unit_kernel,
                               H=H, W=W, cmid=cmid, growth=growth)
    return pl.pallas_call(
        kernel,
        out_shape=jax.ShapeDtypeStruct((N, H * W, growth), out_dtype),
        grid=(N,),
        in_specs=[
            pl.BlockSpec((1, H * W, c_total), lambda n: (n, 0, 0)),
            pl.BlockSpec((1, c_total), lambda n: (0, 0)),
            pl.BlockSpec((1, c_total), lambda n: (0, 0)),
            pl.BlockSpec((c_total, cmid), lambda n: (0, 0)),
            pl.BlockSpec((1, cmid), lambda n: (0, 0)),
            pl.BlockSpec((9, cmid, growth), lambda n: (0, 0, 0)),
        ],
        out_specs=pl.BlockSpec((1, H * W, growth), lambda n: (n, 0, 0)),
        scratch_shapes=[pltpu.VMEM((H + 2, W + 2, cmid), jnp.float32)],
        compiler_params=pltpu.CompilerParams(
            dimension_semantics=("parallel",),
            # > v5e's 16 MiB scoped default, < v7x's 64 MiB physical VMEM.
            vmem_limit_bytes=48 * 1024 * 1024,
        ),
    )


# -----------------------------  param preparation ---------------------------

def prepare_dense_block_params(raw_params, in_channel, growth_rate):
    """Fold BN2 scale into W1, zero-pad per-unit params to C_total, cast
    matmul weights to bf16.  One-time transform (not per-call compute)."""
    n_unit = len(raw_params)
    c_total = in_channel + n_unit * growth_rate
    prepared = []
    for i, p in enumerate(raw_params):
        cin = in_channel + i * growth_rate
        pad = c_total - cin
        s1 = jnp.pad(p["bn1_scale"], ((0, 0), (0, pad)))          # (1, C_total)
        b1 = jnp.pad(p["bn1_shift"], ((0, 0), (0, pad)))          # (1, C_total)
        w1 = jnp.pad(p["w1"], ((0, pad), (0, 0)))                 # (C_total, cmid)
        w1 = (w1 * p["bn2_scale"]).astype(jnp.bfloat16)           # fold BN2 scale
        b2 = p["bn2_shift"].astype(jnp.float32)                   # (1, cmid)
        w2 = p["w2"].reshape(9, -1, p["w2"].shape[-1]).astype(jnp.bfloat16)
        prepared.append(dict(s1=s1, b1=b1, w1=w1, b2=b2, w2=w2))
    return prepared


# -----------------------------  module forward  -----------------------------

def dense_block_forward(prepared, x_nchw):
    n_unit = len(prepared)
    c_total, cmid = prepared[0]["w1"].shape
    growth = prepared[0]["w2"].shape[-1]

    x = jnp.transpose(x_nchw, (0, 2, 3, 1))               # NCHW -> NHWC
    N, H, W, c0 = x.shape
    assert c0 + n_unit * growth == c_total

    unit = _make_dense_unit_call(N, H, W, c_total, cmid, growth, x.dtype)

    # Pre-allocated channel buffer in the final torch.cat(features, 1) layout:
    # [init | unit1 | unit2 | ...].  No per-unit or final concatenation.
    feat = jnp.pad(x.reshape(N, H * W, c0),
                   ((0, 0), (0, 0), (0, n_unit * growth)))
    for i, p in enumerate(prepared):
        new = unit(feat, p["s1"], p["b1"], p["w1"], p["b2"], p["w2"])
        feat = lax.dynamic_update_slice(feat, new, (0, 0, c0 + i * growth))

    out = feat.reshape(N, H, W, c_total)
    return jnp.transpose(out, (0, 3, 1, 2))               # NHWC -> NCHW
    # TODO(synk): dropout(p_dropout) is identity in eval mode; not implemented.
    # TODO(synk): `activation` is assumed to be ReLU (standard DenseNet).


# -----------------------------  params / reference  -------------------------

def _fold_bn(key, c, eps=1e-5):
    k1, k2, k3, k4 = jax.random.split(key, 4)
    gamma = 1.0 + 0.1 * jax.random.normal(k1, (c,), jnp.float32)
    beta = 0.1 * jax.random.normal(k2, (c,), jnp.float32)
    mean = 0.1 * jax.random.normal(k3, (c,), jnp.float32)
    var = 1.0 + 0.1 * jnp.abs(jax.random.normal(k4, (c,), jnp.float32))
    scale = gamma / jnp.sqrt(var + eps)
    shift = beta - mean * scale
    return scale.reshape(1, c), shift.reshape(1, c)


def init_dense_block_params(key, n_unit, in_channel, expansion, growth_rate):
    cmid = expansion * growth_rate
    params_list = []
    for i in range(n_unit):
        cin = in_channel + i * growth_rate
        key, kb1, kw1, kb2, kw2 = jax.random.split(key, 5)
        s1, b1 = _fold_bn(kb1, cin)
        w1 = jax.random.normal(kw1, (cin, cmid), jnp.float32) * (2.0 / cin) ** 0.5
        s2, b2 = _fold_bn(kb2, cmid)
        w2 = jax.random.normal(kw2, (3, 3, cmid, growth_rate), jnp.float32) \
            * (2.0 / (9 * cmid)) ** 0.5
        params_list.append(dict(bn1_scale=s1, bn1_shift=b1, w1=w1,
                                bn2_scale=s2, bn2_shift=b2, w2=w2))
    return params_list


def dense_block_reference(raw_params, x_nchw):
    """Pure-JAX f32 reference mirroring the PyTorch module structure."""
    x = jnp.transpose(x_nchw, (0, 2, 3, 1))
    features = [x]
    for p in raw_params:
        h = jnp.concatenate(features, axis=-1)
        h = jnp.maximum(h * p["bn1_scale"].reshape(1, 1, 1, -1)
                        + p["bn1_shift"].reshape(1, 1, 1, -1), 0.0)
        h = jnp.einsum("nhwc,cd->nhwd", h, p["w1"])
        h = jnp.maximum(h * p["bn2_scale"].reshape(1, 1, 1, -1)
                        + p["bn2_shift"].reshape(1, 1, 1, -1), 0.0)
        h = lax.conv_general_dilated(h, p["w2"], (1, 1), "SAME",
                                     dimension_numbers=("NHWC", "HWIO", "NHWC"))
        features.append(h)
    out = jnp.concatenate(features, axis=-1)
    return jnp.transpose(out, (0, 3, 1, 2))


# -----------------------------  main  ---------------------------------------

if __name__ == "__main__":
    key = jax.random.PRNGKey(0)
    N, C, H, W = 2, 4, 16, 16
    n_unit, expansion, growth_rate = 2, 2, 4

    kx, kp = jax.random.split(key)
    x = jax.random.normal(kx, (N, C, H, W), jnp.float32)
    raw_params = init_dense_block_params(kp, n_unit, C, expansion, growth_rate)
    params = prepare_dense_block_params(raw_params, C, growth_rate)

    fwd = jax.jit(dense_block_forward)
    out = jax.block_until_ready(fwd(params, x))

    assert out.shape == (N, C + n_unit * growth_rate, H, W), out.shape
    ref = dense_block_reference(raw_params, x)
    err = float(jnp.max(jnp.abs(out - ref)))
    # Kernel uses bf16 MXU inputs (f32 accumulation) vs the f32 reference,
    # so allow a bf16-sized tolerance; structural bugs would give O(1) errors.
    assert jnp.allclose(out, ref, atol=5e-2, rtol=5e-2), err
    print("KERNEL_OK")
</pallas_src>

<mosaic_0001>
module attributes {stable_mosaic.version = 11 : i64} {
  func.func @_dense_unit_kernel(%arg0: i32, %arg1: memref<1x256x12xf32, #tpu.memory_space<vmem>>, %arg2: memref<1x12xf32, #tpu.memory_space<vmem>>, %arg3: memref<1x12xf32, #tpu.memory_space<vmem>>, %arg4: memref<12x8xbf16, #tpu.memory_space<vmem>>, %arg5: memref<1x8xf32, #tpu.memory_space<vmem>>, %arg6: memref<9x8x4xbf16, #tpu.memory_space<vmem>>, %arg7: memref<1x256x4xf32, #tpu.memory_space<vmem>>, %arg8: memref<18x18x8xf32, #tpu.memory_space<vmem>>) attributes {dimension_semantics = [#tpu.dimension_semantics<parallel>], iteration_bounds = array<i64: 2>, scalar_prefetch = 0 : i64, scratch_operands = 1 : i64, tpu.core_type = #tpu.core_type<tc>, window_params = [{transform_indices = @transform_0, window_bounds = array<i64: 1, 256, 12>}, {pipeline_mode = #tpu.pipeline_mode<synchronous>, transform_indices = @transform_1, window_bounds = array<i64: 1, 12>}, {pipeline_mode = #tpu.pipeline_mode<synchronous>, transform_indices = @transform_2, window_bounds = array<i64: 1, 12>}, {pipeline_mode = #tpu.pipeline_mode<synchronous>, transform_indices = @transform_3, window_bounds = array<i64: 12, 8>}, {pipeline_mode = #tpu.pipeline_mode<synchronous>, transform_indices = @transform_4, window_bounds = array<i64: 1, 8>}, {pipeline_mode = #tpu.pipeline_mode<synchronous>, transform_indices = @transform_5, window_bounds = array<i64: 9, 8, 4>}, {transform_indices = @transform_6, window_bounds = array<i64: 1, 256, 4>}]} {
    %c0_i32 = arith.constant 0 : i32
    %0 = arith.cmpi eq, %arg0, %c0_i32 : i32
    %1 = arith.extui %0 : i1 to i32
    %c0_i32_0 = arith.constant 0 : i32
    %2 = arith.cmpi ne, %1, %c0_i32_0 : i32
    scf.if %2 {
      %cst_75 = arith.constant 0.000000e+00 : f32
      %90 = vector.broadcast %cst_75 : f32 to vector<18x18x8xf32>
      %c0_76 = arith.constant 0 : index
      %c0_77 = arith.constant 0 : index
      %c0_78 = arith.constant 0 : index
      %91 = vector.load %arg8[%c0_76, %c0_77, %c0_78] : memref<18x18x8xf32, #tpu.memory_space<vmem>>, vector<18x18x8xf32>
      tpu.vector_store %arg8[%c0_76, %c0_77, %c0_78], %90 {strides = array<i32>} : memref<18x18x8xf32, #tpu.memory_space<vmem>>, vector<18x18x8xf32>,
    } else {
    }
    %c0 = arith.constant 0 : index
    %c0_1 = arith.constant 0 : index
    %c0_2 = arith.constant 0 : index
    %3 = vector.load %arg1[%c0, %c0_1, %c0_2] : memref<1x256x12xf32, #tpu.memory_space<vmem>>, vector<1x256x12xf32>
    %4 = vector.shape_cast %3 : vector<1x256x12xf32> to vector<256x12xf32>
    %c0_3 = arith.constant 0 : index
    %c0_4 = arith.constant 0 : index
    %5 = vector.load %arg2[%c0_3, %c0_4] : memref<1x12xf32, #tpu.memory_space<vmem>>, vector<1x12xf32>
    %6 = vector.broadcast %5 : vector<1x12xf32> to vector<256x12xf32>
    %7 = arith.mulf %4, %6 : vector<256x12xf32>
    %c0_5 = arith.constant 0 : index
    %c0_6 = arith.constant 0 : index
    %8 = vector.load %arg3[%c0_5, %c0_6] : memref<1x12xf32, #tpu.memory_space<vmem>>, vector<1x12xf32>
    %9 = vector.broadcast %8 : vector<1x12xf32> to vector<256x12xf32>
    %10 = arith.addf %7, %9 : vector<256x12xf32>
    %cst = arith.constant 0.000000e+00 : f32
    %11 = vector.broadcast %cst : f32 to vector<256x12xf32>
    %12 = arith.maximumf %10, %11 : vector<256x12xf32>
    %13 = arith.truncf %12 : vector<256x12xf32> to vector<256x12xbf16>
    %c0_7 = arith.constant 0 : index
    %c0_8 = arith.constant 0 : index
    %14 = vector.load %arg4[%c0_7, %c0_8] : memref<12x8xbf16, #tpu.memory_space<vmem>>, vector<12x8xbf16>
    %cst_9 = arith.constant dense<0.000000e+00> : vector<256x8xf32>
    %15 = tpu.matmul %13, %14, %cst_9 {dimension_numbers = #tpu.dot_dimension_numbers<[1], [0], [0], [1], [0, 0, 1, 1], [], []>} : vector<256x12xbf16>, vector<12x8xbf16>, vector<256x8xf32> -> vector<256x8xf32>
    %c0_10 = arith.constant 0 : index
    %c0_11 = arith.constant 0 : index
    %16 = vector.load %arg5[%c0_10, %c0_11] : memref<1x8xf32, #tpu.memory_space<vmem>>, vector<1x8xf32>
    %17 = vector.broadcast %16 : vector<1x8xf32> to vector<256x8xf32>
    %18 = arith.addf %15, %17 : vector<256x8xf32>
    %cst_12 = arith.constant 0.000000e+00 : f32
    %19 = vector.broadcast %cst_12 : f32 to vector<256x8xf32>
    %20 = arith.maximumf %18, %19 : vector<256x8xf32>
    %21 = vector.shape_cast %20 : vector<256x8xf32> to vector<16x16x8xf32>
    %c1 = arith.constant 1 : index
    %c1_13 = arith.constant 1 : index
    %c0_14 = arith.constant 0 : index
    %22 = vector.load %arg8[%c1, %c1_13, %c0_14] : memref<18x18x8xf32, #tpu.memory_space<vmem>>, vector<16x16x8xf32>
    tpu.vector_store %arg8[%c1, %c1_13, %c0_14], %21 {strides = array<i32>} : memref<18x18x8xf32, #tpu.memory_space<vmem>>, vector<16x16x8xf32>,
    %cst_15 = arith.constant 0.000000e+00 : f32
    %23 = vector.broadcast %cst_15 : f32 to vector<256x4xf32>
    %c0_16 = arith.constant 0 : index
    %c0_17 = arith.constant 0 : index
    %c0_18 = arith.constant 0 : index
    %24 = vector.load %arg8[%c0_16, %c0_17, %c0_18] : memref<18x18x8xf32, #tpu.memory_space<vmem>>, vector<16x16x8xf32>
    %25 = vector.shape_cast %24 : vector<16x16x8xf32> to vector<256x8xf32>
    %26 = arith.truncf %25 : vector<256x8xf32> to vector<256x8xbf16>
    %c0_19 = arith.constant 0 : index
    %c0_20 = arith.constant 0 : index
    %c0_21 = arith.constant 0 : index
    %27 = vector.load %arg6[%c0_19, %c0_20, %c0_21] : memref<9x8x4xbf16, #tpu.memory_space<vmem>>, vector<1x8x4xbf16>
    %28 = vector.shape_cast %27 : vector<1x8x4xbf16> to vector<8x4xbf16>
    %cst_22 = arith.constant dense<0.000000e+00> : vector<256x4xf32>
    %29 = tpu.matmul %26, %28, %cst_22 {dimension_numbers = #tpu.dot_dimension_numbers<[1], [0], [0], [1], [0, 0, 1, 1], [], []>} : vector<256x8xbf16>, vector<8x4xbf16>, vector<256x4xf32> -> vector<256x4xf32>
    %30 = arith.addf %23, %29 : vector<256x4xf32>
    %c0_23 = arith.constant 0 : index
    %c1_24 = arith.constant 1 : index
    %c0_25 = arith.constant 0 : index
    %31 = vector.load %arg8[%c0_23, %c1_24, %c0_25] : memref<18x18x8xf32, #tpu.memory_space<vmem>>, vector<16x16x8xf32>
    %32 = vector.shape_cast %31 : vector<16x16x8xf32> to vector<256x8xf32>
    %33 = arith.truncf %32 : vector<256x8xf32> to vector<256x8xbf16>
    %c1_26 = arith.constant 1 : index
    %c0_27 = arith.constant 0 : index
    %c0_28 = arith.constant 0 : index
    %34 = vector.load %arg6[%c1_26, %c0_27, %c0_28] : memref<9x8x4xbf16, #tpu.memory_space<vmem>>, vector<1x8x4xbf16>
    %35 = vector.shape_cast %34 : vector<1x8x4xbf16> to vector<8x4xbf16>
    %cst_29 = arith.constant dense<0.000000e+00> : vector<256x4xf32>
    %36 = tpu.matmul %33, %35, %cst_29 {dimension_numbers = #tpu.dot_dimension_numbers<[1], [0], [0], [1], [0, 0, 1, 1], [], []>} : vector<256x8xbf16>, vector<8x4xbf16>, vector<256x4xf32> -> vector<256x4xf32>
    %37 = arith.addf %30, %36 : vector<256x4xf32>
    %c0_30 = arith.constant 0 : index
    %c2 = arith.constant 2 : index
    %c0_31 = arith.constant 0 : index
    %38 = vector.load %arg8[%c0_30, %c2, %c0_31] : memref<18x18x8xf32, #tpu.memory_space<vmem>>, vector<16x16x8xf32>
    %39 = vector.shape_cast %38 : vector<16x16x8xf32> to vector<256x8xf32>
    %40 = arith.truncf %39 : vector<256x8xf32> to vector<256x8xbf16>
    %c2_32 = arith.constant 2 : index
    %c0_33 = arith.constant 0 : index
    %c0_34 = arith.constant 0 : index
    %41 = vector.load %arg6[%c2_32, %c0_33, %c0_34] : memref<9x8x4xbf16, #tpu.memory_space<vmem>>, vector<1x8x4xbf16>
    %42 = vector.shape_cast %41 : vector<1x8x4xbf16> to vector<8x4xbf16>
    %cst_35 = arith.constant dense<0.000000e+00> : vector<256x4xf32>
    %43 = tpu.matmul %40, %42, %cst_35 {dimension_numbers = #tpu.dot_dimension_numbers<[1], [0], [0], [1], [0, 0, 1, 1], [], []>} : vector<256x8xbf16>, vector<8x4xbf16>, vector<256x4xf32> -> vector<256x4xf32>
    %44 = arith.addf %37, %43 : vector<256x4xf32>
    %c1_36 = arith.constant 1 : index
    %c0_37 = arith.constant 0 : index
    %c0_38 = arith.constant 0 : index
    %45 = vector.load %arg8[%c1_36, %c0_37, %c0_38] : memref<18x18x8xf32, #tpu.memory_space<vmem>>, vector<16x16x8xf32>
    %46 = vector.shape_cast %45 : vector<16x16x8xf32> to vector<256x8xf32>
    %47 = arith.truncf %46 : vector<256x8xf32> to vector<256x8xbf16>
    %c3 = arith.constant 3 : index
    %c0_39 = arith.constant 0 : index
    %c0_40 = arith.constant 0 : index
    %48 = vector.load %arg6[%c3, %c0_39, %c0_40] : memref<9x8x4xbf16, #tpu.memory_space<vmem>>, vector<1x8x4xbf16>
    %49 = vector.shape_cast %48 : vector<1x8x4xbf16> to vector<8x4xbf16>
    %cst_41 = arith.constant dense<0.000000e+00> : vector<256x4xf32>
    %50 = tpu.matmul %47, %49, %cst_41 {dimension_numbers = #tpu.dot_dimension_numbers<[1], [0], [0], [1], [0, 0, 1, 1], [], []>} : vector<256x8xbf16>, vector<8x4xbf16>, vector<256x4xf32> -> vector<256x4xf32>
    %51 = arith.addf %44, %50 : vector<256x4xf32>
    %c1_42 = arith.constant 1 : index
    %c1_43 = arith.constant 1 : index
    %c0_44 = arith.constant 0 : index
    %52 = vector.load %arg8[%c1_42, %c1_43, %c0_44] : memref<18x18x8xf32, #tpu.memory_space<vmem>>, vector<16x16x8xf32>
    %53 = vector.shape_cast %52 : vector<16x16x8xf32> to vector<256x8xf32>
    %54 = arith.truncf %53 : vector<256x8xf32> to vector<256x8xbf16>
    %c4 = arith.constant 4 : index
    %c0_45 = arith.constant 0 : index
    %c0_46 = arith.constant 0 : index
    %55 = vector.load %arg6[%c4, %c0_45, %c0_46] : memref<9x8x4xbf16, #tpu.memory_space<vmem>>, vector<1x8x4xbf16>
    %56 = vector.shape_cast %55 : vector<1x8x4xbf16> to vector<8x4xbf16>
    %cst_47 = arith.constant dense<0.000000e+00> : vector<256x4xf32>
    %57 = tpu.matmul %54, %56, %cst_47 {dimension_numbers = #tpu.dot_dimension_numbers<[1], [0], [0], [1], [0, 0, 1, 1], [], []>} : vector<256x8xbf16>, vector<8x4xbf16>, vector<256x4xf32> -> vector<256x4xf32>
    %58 = arith.addf %51, %57 : vector<256x4xf32>
    %c1_48 = arith.constant 1 : index
    %c2_49 = arith.constant 2 : index
    %c0_50 = arith.constant 0 : index
    %59 = vector.load %arg8[%c1_48, %c2_49, %c0_50] : memref<18x18x8xf32, #tpu.memory_space<vmem>>, vector<16x16x8xf32>
    %60 = vector.shape_cast %59 : vector<16x16x8xf32> to vector<256x8xf32>
    %61 = arith.truncf %60 : vector<256x8xf32> to vector<256x8xbf16>
    %c5 = arith.constant 5 : index
    %c0_51 = arith.constant 0 : index
    %c0_52 = arith.constant 0 : index
    %62 = vector.load %arg6[%c5, %c0_51, %c0_52] : memref<9x8x4xbf16, #tpu.memory_space<vmem>>, vector<1x8x4xbf16>
    %63 = vector.shape_cast %62 : vector<1x8x4xbf16> to vector<8x4xbf16>
    %cst_53 = arith.constant dense<0.000000e+00> : vector<256x4xf32>
    %64 = tpu.matmul %61, %63, %cst_53 {dimension_numbers = #tpu.dot_dimension_numbers<[1], [0], [0], [1], [0, 0, 1, 1], [], []>} : vector<256x8xbf16>, vector<8x4xbf16>, vector<256x4xf32> -> vector<256x4xf32>
    %65 = arith.addf %58, %64 : vector<256x4xf32>
    %c2_54 = arith.constant 2 : index
    %c0_55 = arith.constant 0 : index
    %c0_56 = arith.constant 0 : index
    %66 = vector.load %arg8[%c2_54, %c0_55, %c0_56] : memref<18x18x8xf32, #tpu.memory_space<vmem>>, vector<16x16x8xf32>
    %67 = vector.shape_cast %66 : vector<16x16x8xf32> to vector<256x8xf32>
    %68 = arith.truncf %67 : vector<256x8xf32> to vector<256x8xbf16>
    %c6 = arith.constant 6 : index
    %c0_57 = arith.constant 0 : index
    %c0_58 = arith.constant 0 : index
    %69 = vector.load %arg6[%c6, %c0_57, %c0_58] : memref<9x8x4xbf16, #tpu.memory_space<vmem>>, vector<1x8x4xbf16>
    %70 = vector.shape_cast %69 : vector<1x8x4xbf16> to vector<8x4xbf16>
    %cst_59 = arith.constant dense<0.000000e+00> : vector<256x4xf32>
    %71 = tpu.matmul %68, %70, %cst_59 {dimension_numbers = #tpu.dot_dimension_numbers<[1], [0], [0], [1], [0, 0, 1, 1], [], []>} : vector<256x8xbf16>, vector<8x4xbf16>, vector<256x4xf32> -> vector<256x4xf32>
    %72 = arith.addf %65, %71 : vector<256x4xf32>
    %c2_60 = arith.constant 2 : index
    %c1_61 = arith.constant 1 : index
    %c0_62 = arith.constant 0 : index
    %73 = vector.load %arg8[%c2_60, %c1_61, %c0_62] : memref<18x18x8xf32, #tpu.memory_space<vmem>>, vector<16x16x8xf32>
    %74 = vector.shape_cast %73 : vector<16x16x8xf32> to vector<256x8xf32>
    %75 = arith.truncf %74 : vector<256x8xf32> to vector<256x8xbf16>
    %c7 = arith.constant 7 : index
    %c0_63 = arith.constant 0 : index
    %c0_64 = arith.constant 0 : index
    %76 = vector.load %arg6[%c7, %c0_63, %c0_64] : memref<9x8x4xbf16, #tpu.memory_space<vmem>>, vector<1x8x4xbf16>
    %77 = vector.shape_cast %76 : vector<1x8x4xbf16> to vector<8x4xbf16>
    %cst_65 = arith.constant dense<0.000000e+00> : vector<256x4xf32>
    %78 = tpu.matmul %75, %77, %cst_65 {dimension_numbers = #tpu.dot_dimension_numbers<[1], [0], [0], [1], [0, 0, 1, 1], [], []>} : vector<256x8xbf16>, vector<8x4xbf16>, vector<256x4xf32> -> vector<256x4xf32>
    %79 = arith.addf %72, %78 : vector<256x4xf32>
    %c2_66 = arith.constant 2 : index
    %c2_67 = arith.constant 2 : index
    %c0_68 = arith.constant 0 : index
    %80 = vector.load %arg8[%c2_66, %c2_67, %c0_68] : memref<18x18x8xf32, #tpu.memory_space<vmem>>, vector<16x16x8xf32>
    %81 = vector.shape_cast %80 : vector<16x16x8xf32> to vector<256x8xf32>
    %82 = arith.truncf %81 : vector<256x8xf32> to vector<256x8xbf16>
    %c8 = arith.constant 8 : index
    %c0_69 = arith.constant 0 : index
    %c0_70 = arith.constant 0 : index
    %83 = vector.load %arg6[%c8, %c0_69, %c0_70] : memref<9x8x4xbf16, #tpu.memory_space<vmem>>, vector<1x8x4xbf16>
    %84 = vector.shape_cast %83 : vector<1x8x4xbf16> to vector<8x4xbf16>
    %cst_71 = arith.constant dense<0.000000e+00> : vector<256x4xf32>
    %85 = tpu.matmul %82, %84, %cst_71 {dimension_numbers = #tpu.dot_dimension_numbers<[1], [0], [0], [1], [0, 0, 1, 1], [], []>} : vector<256x8xbf16>, vector<8x4xbf16>, vector<256x4xf32> -> vector<256x4xf32>
    %86 = arith.addf %79, %85 : vector<256x4xf32>
    %c0_72 = arith.constant 0 : index
    %c0_73 = arith.constant 0 : index
    %c0_74 = arith.constant 0 : index
    %87 = vector.load %arg7[%c0_72, %c0_73, %c0_74] : memref<1x256x4xf32, #tpu.memory_space<vmem>>, vector<1x256x4xf32>
    %88 = vector.shape_cast %87 : vector<1x256x4xf32> to vector<256x4xf32>
    %89 = vector.shape_cast %86 : vector<256x4xf32> to vector<1x256x4xf32>
    tpu.vector_store %arg7[%c0_72, %c0_73, %c0_74], %89 {strides = array<i32>} : memref<1x256x4xf32, #tpu.memory_space<vmem>>, vector<1x256x4xf32>,
    return
  }
  func.func @transform_0(%arg0: i32) -> (i32, i32, i32) {
    %c0_i32 = arith.constant 0 : i32
    %c0_i32_0 = arith.constant 0 : i32
    %c0_i32_1 = arith.constant 0 : i32
    return %arg0, %c0_i32, %c0_i32_0 : i32, i32, i32
  }
  func.func @transform_1(%arg0: i32) -> (i32, i32) {
    %c0_i32 = arith.constant 0 : i32
    %c0_i32_0 = arith.constant 0 : i32
    %c0_i32_1 = arith.constant 0 : i32
    return %c0_i32, %c0_i32_0 : i32, i32
  }
  func.func @transform_2(%arg0: i32) -> (i32, i32) {
    %c0_i32 = arith.constant 0 : i32
    %c0_i32_0 = arith.constant 0 : i32
    %c0_i32_1 = arith.constant 0 : i32
    return %c0_i32, %c0_i32_0 : i32, i32
  }
  func.func @transform_3(%arg0: i32) -> (i32, i32) {
    %c0_i32 = arith.constant 0 : i32
    %c0_i32_0 = arith.constant 0 : i32
    %c0_i32_1 = arith.constant 0 : i32
    return %c0_i32, %c0_i32_0 : i32, i32
  }
  func.func @transform_4(%arg0: i32) -> (i32, i32) {
    %c0_i32 = arith.constant 0 : i32
    %c0_i32_0 = arith.constant 0 : i32
    %c0_i32_1 = arith.constant 0 : i32
    return %c0_i32, %c0_i32_0 : i32, i32
  }
  func.func @transform_5(%arg0: i32) -> (i32, i32, i32) {
    %c0_i32 = arith.constant 0 : i32
    %c0_i32_0 = arith.constant 0 : i32
    %c0_i32_1 = arith.constant 0 : i32
    %c0_i32_2 = arith.constant 0 : i32
    return %c0_i32, %c0_i32_0, %c0_i32_1 : i32, i32, i32
  }
  func.func @transform_6(%arg0: i32) -> (i32, i32, i32) {
    %c0_i32 = arith.constant 0 : i32
    %c0_i32_0 = arith.constant 0 : i32
    %c0_i32_1 = arith.constant 0 : i32
    return %arg0, %c0_i32, %c0_i32_0 : i32, i32, i32
  }
}

</mosaic_0001>

<llo_original>
// kernel: dense_block_forward.2
$region0: #{dense_block_forward.2}
  #allocation0 [shape = 'u32[]', space=smem, size = 0x4, offset = 0x4, fixed_abs, tag = 'smem constant byte address 0x4 - core index']
  #allocation1 [shape = 'u32[72,128]{1,0:T(1,128)}', space=vmem, size = 0x9000, scoped, tag = 'internal scratch']
  #allocation2 [shape = 'f32[18,18,8]{2,1,0:T(8,128)}', space=vmem, size = 0x36000, scoped, tag = 'scratch operand']
  %s0 = inlined_call_operand.vmem [shape: f32[2,256,12], index: 0, kind: input, shape index: {}]
  %s1 = inlined_call_operand.vmem [shape: f32[1,12], index: 1, kind: input, shape index: {}]
  %s2 = inlined_call_operand.vmem [shape: f32[1,12], index: 2, kind: input, shape index: {}]
  %s3 = inlined_call_operand.vmem [shape: bf16[12,8], index: 3, kind: input, shape index: {}]
  %s4 = inlined_call_operand.vmem [shape: f32[1,8], index: 4, kind: input, shape index: {}]
  %s5 = inlined_call_operand.vmem [shape: bf16[9,8,4], index: 5, kind: input, shape index: {}]
  %s6 = inlined_call_operand.vmem [shape: f32[2,256,4], index: 6, kind: output, shape index: {}]
  %s7 = sld [smem:[#allocation0]]
  $region61: #{dense_block_forward.2} parent=0
    _
  %s9 = ssub.s32 1, %s7
  %s10 = scalar_select 0, %s9, %s7
  loop: start=0, step=1, limit=4
  $region2: #{dense_block_forward.2} parent=0 // loop_pre_header
    _
  $region3: #{dense_block_forward.2} parent=0 // loop_header
    %s12 = sphi 0, %s16
    %p13 = scmp.ge.s32.totalorder %s12, 4
    %s22 = sphi 0, %s24
    %s25 = sphi 0, %s22
    %s26 = sphi 0, %s25
    %s42 = sphi 0, %s26
    %s46 = sphi 0, %s46
    %s48 = sphi 0, %s46
    %s49 = sphi 0, %s48
    %s63 = sphi 0, %s49
    %s67 = sphi 0, %s67
    %s69 = sphi 0, %s67
    %s70 = sphi 0, %s69
    %s84 = sphi 0, %s70
    %s88 = sphi 0, %s88
    %s90 = sphi 0, %s88
    %s91 = sphi 0, %s90
    %s105 = sphi 0, %s91
    %s109 = sphi 0, %s109
    %s111 = sphi 0, %s109
    %s112 = sphi 0, %s111
    %s126 = sphi 0, %s112
    %s130 = sphi 0, %s130
    %s132 = sphi 0, %s130
    %s133 = sphi 0, %s132
    %s147 = sphi 0, %s133
    %s153 = sphi 0, %s155
    %s156 = sphi 0, %s153
    %s157 = sphi 0, %s156
    %s173 = sphi 0, %s157
  $region4: #{dense_block_forward.2} parent=0 // loop_header_branch
    %15 = sbr.rel (%p13) target = $region8
  $region5: #{dense_block_forward.2} parent=0 // loop_body
    %s17 = ssub.s32 %s12, 1
    %s18 = ssub.s32 %s12, 2
    %s19 = sadd.s32 %s12, 1
    %s20 = ssub.s32 %s12, %s19
    %p21 = scmp.eq.s32.totalorder %s20, 0
    %s23 = sadd.s32 %s22, 1
    %s24 = scalar_select %p21, %s22, %s23
    %p27 = pneg %p21
    %p28 = scmp.eq.s32.totalorder %s12, 1
    %p29 = por %p27, %p28
    %p30 = scmp.ne.s32.totalorder %s22, %s25
    %p31 = scmp.eq.s32.totalorder %s12, 0
    %p32 = por %p30, %p31
    %p33 = scmp.ne.s32.totalorder %s22, %s25
    %p34 = scmp.eq.s32.totalorder %s17, 1
    %p35 = por %p33, %p34
    %p36 = scmp.ne.s32.totalorder %s25, %s26
    %p37 = scmp.eq.s32.totalorder %s17, 0
    %p38 = por %p36, %p37
    %p39 = scmp.ne.s32.totalorder %s25, %s26
    %p40 = scmp.eq.s32.totalorder %s18, 1
    %p41 = por %p39, %p40
    %p43 = scmp.ne.s32.totalorder %s26, %s42
    %p44 = scmp.eq.s32.totalorder %s18, 0
    %p45 = por %p43, %p44
    %s47 = sadd.s32 %s46, 1
    %p50 = scmp.eq.s32.totalorder %s12, 1
    %p51 = scmp.ne.s32.totalorder %s46, %s48
    %p52 = scmp.eq.s32.totalorder %s12, 0
    %p53 = por %p51, %p52
    %p54 = scmp.ne.s32.totalorder %s46, %s48
    %p55 = scmp.eq.s32.totalorder %s17, 1
    %p56 = por %p54, %p55
    %p57 = scmp.ne.s32.totalorder %s48, %s49
    %p58 = scmp.eq.s32.totalorder %s17, 0
    %p59 = por %p57, %p58
    %p60 = scmp.ne.s32.totalorder %s48, %s49
    %p61 = scmp.eq.s32.totalorder %s18, 1
    %p62 = por %p60, %p61
    %p64 = scmp.ne.s32.totalorder %s49, %s63
    %p65 = scmp.eq.s32.totalorder %s18, 0
    %p66 = por %p64, %p65
    %s68 = sadd.s32 %s67, 1
    %p71 = scmp.eq.s32.totalorder %s12, 1
    %p72 = scmp.ne.s32.totalorder %s67, %s69
    %p73 = scmp.eq.s32.totalorder %s12, 0
    %p74 = por %p72, %p73
    %p75 = scmp.ne.s32.totalorder %s67, %s69
    %p76 = scmp.eq.s32.totalorder %s17, 1
    %p77 = por %p75, %p76
    %p78 = scmp.ne.s32.totalorder %s69, %s70
    %p79 = scmp.eq.s32.totalorder %s17, 0
    %p80 = por %p78, %p79
    %p81 = scmp.ne.s32.totalorder %s69, %s70
    %p82 = scmp.eq.s32.totalorder %s18, 1
    %p83 = por %p81, %p82
    %p85 = scmp.ne.s32.totalorder %s70, %s84
    %p86 = scmp.eq.s32.totalorder %s18, 0
    %p87 = por %p85, %p86
    %s89 = sadd.s32 %s88, 1
    %p92 = scmp.eq.s32.totalorder %s12, 1
    %p93 = scmp.ne.s32.totalorder %s88, %s90
    %p94 = scmp.eq.s32.totalorder %s12, 0
    %p95 = por %p93, %p94
    %p96 = scmp.ne.s32.totalorder %s88, %s90
    %p97 = scmp.eq.s32.totalorder %s17, 1
    %p98 = por %p96, %p97
    %p99 = scmp.ne.s32.totalorder %s90, %s91
    %p100 = scmp.eq.s32.totalorder %s17, 0
    %p101 = por %p99, %p100
    %p102 = scmp.ne.s32.totalorder %s90, %s91
    %p103 = scmp.eq.s32.totalorder %s18, 1
    %p104 = por %p102, %p103
    %p106 = scmp.ne.s32.totalorder %s91, %s105
    %p107 = scmp.eq.s32.totalorder %s18, 0
    %p108 = por %p106, %p107
    %s110 = sadd.s32 %s109, 1
    %p113 = scmp.eq.s32.totalorder %s12, 1
    %p114 = scmp.ne.s32.totalorder %s109, %s111
    %p115 = scmp.eq.s32.totalorder %s12, 0
    %p116 = por %p114, %p115
    %p117 = scmp.ne.s32.totalorder %s109, %s111
    %p118 = scmp.eq.s32.totalorder %s17, 1
    %p119 = por %p117, %p118
    %p120 = scmp.ne.s32.totalorder %s111, %s112
    %p121 = scmp.eq.s32.totalorder %s17, 0
    %p122 = por %p120, %p121
    %p123 = scmp.ne.s32.totalorder %s111, %s112
    %p124 = scmp.eq.s32.totalorder %s18, 1
    %p125 = por %p123, %p124
    %p127 = scmp.ne.s32.totalorder %s112, %s126
    %p128 = scmp.eq.s32.totalorder %s18, 0
    %p129 = por %p127, %p128
    %s131 = sadd.s32 %s130, 1
    %p134 = scmp.eq.s32.totalorder %s12, 1
    %p135 = scmp.ne.s32.totalorder %s130, %s132
    %p136 = scmp.eq.s32.totalorder %s12, 0
    %p137 = por %p135, %p136
    %p138 = scmp.ne.s32.totalorder %s130, %s132
    %p139 = scmp.eq.s32.totalorder %s17, 1
    %p140 = por %p138, %p139
    %p141 = scmp.ne.s32.totalorder %s132, %s133
    %p142 = scmp.eq.s32.totalorder %s17, 0
    %p143 = por %p141, %p142
    %p144 = scmp.ne.s32.totalorder %s132, %s133
    %p145 = scmp.eq.s32.totalorder %s18, 1
    %p146 = por %p144, %p145
    %p148 = scmp.ne.s32.totalorder %s133, %s147
    %p149 = scmp.eq.s32.totalorder %s18, 0
    %p150 = por %p148, %p149
    %s151 = ssub.s32 %s12, %s19
    %p152 = scmp.eq.s32.totalorder %s151, 0
    %s154 = sadd.s32 %s153, 1
    %s155 = scalar_select %p152, %s153, %s154
    %p158 = pneg %p152
    %p159 = scmp.eq.s32.totalorder %s12, 1
    %p160 = por %p158, %p159
    %p161 = scmp.ne.s32.totalorder %s153, %s156
    %p162 = scmp.eq.s32.totalorder %s12, 0
    %p163 = por %p161, %p162
    %p164 = scmp.ne.s32.totalorder %s153, %s156
    %p165 = scmp.eq.s32.totalorder %s17, 1
    %p166 = por %p164, %p165
    %p167 = scmp.ne.s32.totalorder %s156, %s157
    %p168 = scmp.eq.s32.totalorder %s17, 0
    %p169 = por %p167, %p168
    %p170 = scmp.ne.s32.totalorder %s156, %s157
    %p171 = scmp.eq.s32.totalorder %s18, 1
    %p172 = por %p170, %p171
    %p174 = scmp.ne.s32.totalorder %s157, %s173
    %p175 = scmp.eq.s32.totalorder %s18, 0
    %p176 = por %p174, %p175
    %p177 = scmp.le.s32.totalorder 1, %s12
    %p178 = scmp.lt.s32.totalorder %s12, 3
    %p179 = pnand %p177, %p178
    %p180 = pneg %p179
    // Predicated region
    $region9: #{dense_block_forward.2} parent=5 // pred_check
      _
    $region10: #{dense_block_forward.2} parent=5 // pred_check_branch
      %182 = sbr.rel (%p179) target = $region12
    $region11: #{dense_block_forward.2} parent=5 // pred_region
      %s183 = ssub.s32 %s12, 1
      // Predicated region
      $region13: #{dense_block_forward.2} parent=11 // pred_check
        %p184 = pneg %p59
      $region14: #{dense_block_forward.2} parent=11 // pred_check_branch
        %186 = sbr.rel (%p184) target = $region16
      $region15: #{dense_block_forward.2} parent=11 // pred_region
        _
      $region16: #{dense_block_forward.2} parent=11 // pred_fallthru
        _
      // Predicated region
      $region17: #{dense_block_forward.2} parent=11 // pred_check
        %p187 = pneg %p80
      $region18: #{dense_block_forward.2} parent=11 // pred_check_branch
        %189 = sbr.rel (%p187) target = $region20
      $region19: #{dense_block_forward.2} parent=11 // pred_region
        _
      $region20: #{dense_block_forward.2} parent=11 // pred_fallthru
        _
      // Predicated region
      $region21: #{dense_block_forward.2} parent=11 // pred_check
        %p190 = pneg %p101
      $region22: #{dense_block_forward.2} parent=11 // pred_check_branch
        %192 = sbr.rel (%p190) target = $region24
      $region23: #{dense_block_forward.2} parent=11 // pred_region
        _
      $region24: #{dense_block_forward.2} parent=11 // pred_fallthru
        _
      // Predicated region
      $region25: #{dense_block_forward.2} parent=11 // pred_check
        %p193 = pneg %p122
      $region26: #{dense_block_forward.2} parent=11 // pred_check_branch
        %195 = sbr.rel (%p193) target = $region28
      $region27: #{dense_block_forward.2} parent=11 // pred_region
        _
      $region28: #{dense_block_forward.2} parent=11 // pred_fallthru
        _
      // Predicated region
      $region29: #{dense_block_forward.2} parent=11 // pred_check
        %p196 = pneg %p143
      $region30: #{dense_block_forward.2} parent=11 // pred_check_branch
        %198 = sbr.rel (%p196) target = $region32
      $region31: #{dense_block_forward.2} parent=11 // pred_region
        _
      $region32: #{dense_block_forward.2} parent=11 // pred_fallthru
        _
    $region12: #{dense_block_forward.2} parent=5 // pred_fallthru
      _
    %p199 = scmp.lt.s32.totalorder %s12, 2
    // Predicated region
    $region33: #{dense_block_forward.2} parent=5 // pred_check
      %p200 = pneg %p199
    $region34: #{dense_block_forward.2} parent=5 // pred_check_branch
      %202 = sbr.rel (%p200) target = $region36
    $region35: #{dense_block_forward.2} parent=5 // pred_region
      // Predicated region
      $region37: #{dense_block_forward.2} parent=35 // pred_check
        %p203 = pneg %p32
      $region38: #{dense_block_forward.2} parent=35 // pred_check_branch
        %205 = sbr.rel (%p203) target = $region40
      $region39: #{dense_block_forward.2} parent=35 // pred_region
        %p206 = scmp.lt.s32.totalorder %s12, 1
        %s207 = scalar_select %p206, %s12, 1
        %s208 = smul.addr %s207, 32
        %s209 = smul.addr %s208, 8
        %s210 = scalar_lea.vmem %s0, %s209
      $region40: #{dense_block_forward.2} parent=35 // pred_fallthru
        _
    $region36: #{dense_block_forward.2} parent=5 // pred_fallthru
      _
    %p211 = scmp.le.s32.totalorder 1, %s12
    %p212 = scmp.lt.s32.totalorder %s12, 3
    %p213 = pnand %p211, %p212
    %p214 = pneg %p213
    // Predicated region
    $region41: #{dense_block_forward.2} parent=5 // pred_check
      _
    $region42: #{dense_block_forward.2} parent=5 // pred_check_branch
      %216 = sbr.rel (%p213) target = $region44
    $region43: #{dense_block_forward.2} parent=5 // pred_region
      %s217 = ssub.s32 %s12, 1
      %p218 = scmp.lt.s32.totalorder %s17, 1
      %s219 = scalar_select %p218, %s17, 1
      %s220 = smul.addr %s219, 32
      %s221 = smul.addr %s220, 8
      %s222 = scalar_lea.vmem %s0, %s221
      %p223 = pneg %p38
      %p224 = pneg %p35
      %p225 = pneg %p59
      %p226 = pneg %p56
      %p227 = pneg %p80
      %p228 = pneg %p77
      %p229 = pneg %p101
      %p230 = pneg %p98
      %p231 = pneg %p122
      %p232 = pneg %p119
      %p233 = pneg %p143
      %p234 = pneg %p140
      %p235 = pneg %p169
      %p236 = pneg %p166
      %p237 = scmp.lt.s32.totalorder %s17, 1
      %s238 = scalar_select %p237, %s17, 1
      %s239 = smul.addr %s238, 32
      %s240 = smul.addr %s239, 8
      %s241 = scalar_lea.vmem %s6, %s240
      %p242 = scmp.lt.s32.totalorder %s17, 1
      %s243 = scalar_select %p242, %s17, 1
      %s244 = smul.addr %s243, 32
      %s245 = smul.addr %s244, 8
      %s246 = scalar_lea.vmem %s0, %s245
      %p247 = scmp.lt.s32.totalorder %s17, 1
      %s248 = scalar_select %p247, %s17, 1
      %s249 = smul.addr %s248, 32
      %s250 = smul.addr %s249, 8
      %s251 = scalar_lea.vmem %s6, %s250
      %p253 = scmp.eq.s32.totalorder %s17, 0
      // Predicated region
      $region45: #{dense_block_forward.2} parent=43 // pred_check
        %p254 = pneg %p253
      $region46: #{dense_block_forward.2} parent=43 // pred_check_branch
        %256 = sbr.rel (%p254) target = $region48
      $region47: #{dense_block_forward.2} parent=43 // pred_region
        %vm257 = vcmask 64512
        %258 = vst.msk [vmem:[#allocation2] sm:$0xff] %vm257, 0.0
        %259 = vst.msk [vmem:[#allocation2 + $0x8] sm:$0xff] %vm257, 0.0
        %vm260 = vcmask 58368
        %261 = vst.msk [vmem:[#allocation2 + $0x10] sm:$0x3] %vm260, 0.0
        %262 = vst.msk [vmem:[#allocation2 + $0x18] sm:$0xff] %vm257, 0.0
        %263 = vst.msk [vmem:[#allocation2 + $0x20] sm:$0xff] %vm257, 0.0
        %264 = vst.msk [vmem:[#allocation2 + $0x28] sm:$0x3] %vm260, 0.0
        %265 = vst.msk [vmem:[#allocation2 + $0x30] sm:$0xff] %vm257, 0.0
        %266 = vst.msk [vmem:[#allocation2 + $0x38] sm:$0xff] %vm257, 0.0
        %267 = vst.msk [vmem:[#allocation2 + $0x40] sm:$0x3] %vm260, 0.0
        %268 = vst.msk [vmem:[#allocation2 + $0x48] sm:$0xff] %vm257, 0.0
        %269 = vst.msk [vmem:[#allocation2 + $0x50] sm:$0xff] %vm257, 0.0
        %270 = vst.msk [vmem:[#allocation2 + $0x58] sm:$0x3] %vm260, 0.0
        %271 = vst.msk [vmem:[#allocation2 + $0x60] sm:$0xff] %vm257, 0.0
        %272 = vst.msk [vmem:[#allocation2 + $0x68] sm:$0xff] %vm257, 0.0
        %273 = vst.msk [vmem:[#allocation2 + $0x70] sm:$0x3] %vm260, 0.0
        %274 = vst.msk [vmem:[#allocation2 + $0x78] sm:$0xff] %vm257, 0.0
        %275 = vst.msk [vmem:[#allocation2 + $0x80] sm:$0xff] %vm257, 0.0
        %276 = vst.msk [vmem:[#allocation2 + $0x88] sm:$0x3] %vm260, 0.0
        %277 = vst.msk [vmem:[#allocation2 + $0x90] sm:$0xff] %vm257, 0.0
        %278 = vst.msk [vmem:[#allocation2 + $0x98] sm:$0xff] %vm257, 0.0
        %279 = vst.msk [vmem:[#allocation2 + $0xa0] sm:$0x3] %vm260, 0.0
        %280 = vst.msk [vmem:[#allocation2 + $0xa8] sm:$0xff] %vm257, 0.0
        %281 = vst.msk [vmem:[#allocation2 + $0xb0] sm:$0xff] %vm257, 0.0
        %282 = vst.msk [vmem:[#allocation2 + $0xb8] sm:$0x3] %vm260, 0.0
        %283 = vst.msk [vmem:[#allocation2 + $0xc0] sm:$0xff] %vm257, 0.0
        %284 = vst.msk [vmem:[#allocation2 + $0xc8] sm:$0xff] %vm257, 0.0
        %285 = vst.msk [vmem:[#allocation2 + $0xd0] sm:$0x3] %vm260, 0.0
        %286 = vst.msk [vmem:[#allocation2 + $0xd8] sm:$0xff] %vm257, 0.0
        %287 = vst.msk [vmem:[#allocation2 + $0xe0] sm:$0xff] %vm257, 0.0
        %288 = vst.msk [vmem:[#allocation2 + $0xe8] sm:$0x3] %vm260, 0.0
        %289 = vst.msk [vmem:[#allocation2 + $0xf0] sm:$0xff] %vm257, 0.0
        %290 = vst.msk [vmem:[#allocation2 + $0xf8] sm:$0xff] %vm257, 0.0
        %291 = vst.msk [vmem:[#allocation2 + $0x100] sm:$0x3] %vm260, 0.0
        %292 = vst.msk [vmem:[#allocation2 + $0x108] sm:$0xff] %vm257, 0.0
        %293 = vst.msk [vmem:[#allocation2 + $0x110] sm:$0xff] %vm257, 0.0
        %294 = vst.msk [vmem:[#allocation2 + $0x118] sm:$0x3] %vm260, 0.0
        %295 = vst.msk [vmem:[#allocation2 + $0x120] sm:$0xff] %vm257, 0.0
        %296 = vst.msk [vmem:[#allocation2 + $0x128] sm:$0xff] %vm257, 0.0
        %297 = vst.msk [vmem:[#allocation2 + $0x130] sm:$0x3] %vm260, 0.0
        %298 = vst.msk [vmem:[#allocation2 + $0x138] sm:$0xff] %vm257, 0.0
        %299 = vst.msk [vmem:[#allocation2 + $0x140] sm:$0xff] %vm257, 0.0
        %300 = vst.msk [vmem:[#allocation2 + $0x148] sm:$0x3] %vm260, 0.0
        %301 = vst.msk [vmem:[#allocation2 + $0x150] sm:$0xff] %vm257, 0.0
        %302 = vst.msk [vmem:[#allocation2 + $0x158] sm:$0xff] %vm257, 0.0
        %303 = vst.msk [vmem:[#allocation2 + $0x160] sm:$0x3] %vm260, 0.0
        %304 = vst.msk [vmem:[#allocation2 + $0x168] sm:$0xff] %vm257, 0.0
        %305 = vst.msk [vmem:[#allocation2 + $0x170] sm:$0xff] %vm257, 0.0
        %306 = vst.msk [vmem:[#allocation2 + $0x178] sm:$0x3] %vm260, 0.0
        %307 = vst.msk [vmem:[#allocation2 + $0x180] sm:$0xff] %vm257, 0.0
        %308 = vst.msk [vmem:[#allocation2 + $0x188] sm:$0xff] %vm257, 0.0
        %309 = vst.msk [vmem:[#allocation2 + $0x190] sm:$0x3] %vm260, 0.0
        %310 = vst.msk [vmem:[#allocation2 + $0x198] sm:$0xff] %vm257, 0.0
        %311 = vst.msk [vmem:[#allocation2 + $0x1a0] sm:$0xff] %vm257, 0.0
        %312 = vst.msk [vmem:[#allocation2 + $0x1a8] sm:$0x3] %vm260, 0.0
      $region48: #{dense_block_forward.2} parent=43 // pred_fallthru
        _
      %v313 = vld [vmem:[%s246] sm:$0xff]
      %v314 = vld [vmem:[%s246 + $0x8] sm:$0xff]
      %v315 = vld [vmem:[%s246 + $0x10] sm:$0xff]
      %v316 = vld [vmem:[%s246 + $0x18] sm:$0xff]
      %v317 = vld [vmem:[%s246 + $0x20] sm:$0xff]
      %v318 = vld [vmem:[%s246 + $0x28] sm:$0xff]
      %v319 = vld [vmem:[%s246 + $0x30] sm:$0xff]
      %v320 = vld [vmem:[%s246 + $0x38] sm:$0xff]
      %v321 = vld [vmem:[%s246 + $0x40] sm:$0xff]
      %v322 = vld [vmem:[%s246 + $0x48] sm:$0xff]
      %v323 = vld [vmem:[%s246 + $0x50] sm:$0xff]
      %v324 = vld [vmem:[%s246 + $0x58] sm:$0xff]
      %v325 = vld [vmem:[%s246 + $0x60] sm:$0xff]
      %v326 = vld [vmem:[%s246 + $0x68] sm:$0xff]
      %v327 = vld [vmem:[%s246 + $0x70] sm:$0xff]
      %v328 = vld [vmem:[%s246 + $0x78] sm:$0xff]
      %v329 = vld [vmem:[%s246 + $0x80] sm:$0xff]
      %v330 = vld [vmem:[%s246 + $0x88] sm:$0xff]
      %v331 = vld [vmem:[%s246 + $0x90] sm:$0xff]
      %v332 = vld [vmem:[%s246 + $0x98] sm:$0xff]
      %v333 = vld [vmem:[%s246 + $0xa0] sm:$0xff]
      %v334 = vld [vmem:[%s246 + $0xa8] sm:$0xff]
      %v335 = vld [vmem:[%s246 + $0xb0] sm:$0xff]
      %v336 = vld [vmem:[%s246 + $0xb8] sm:$0xff]
      %v337 = vld [vmem:[%s246 + $0xc0] sm:$0xff]
      %v338 = vld [vmem:[%s246 + $0xc8] sm:$0xff]
      %v339 = vld [vmem:[%s246 + $0xd0] sm:$0xff]
      %v340 = vld [vmem:[%s246 + $0xd8] sm:$0xff]
      %v341 = vld [vmem:[%s246 + $0xe0] sm:$0xff]
      %v342 = vld [vmem:[%s246 + $0xe8] sm:$0xff]
      %v343 = vld [vmem:[%s246 + $0xf0] sm:$0xff]
      %v344 = vld [vmem:[%s246 + $0xf8] sm:$0xff]
      %v345 = vld [vmem:[%s1] sm:$0x1]
      %v347 = vperm.slane %v345, 0
      %v349 = vmul.f32 %v313, %v347
      %v350 = vmul.f32 %v314, %v347
      %v351 = vmul.f32 %v315, %v347
      %v352 = vmul.f32 %v316, %v347
      %v353 = vmul.f32 %v317, %v347
      %v354 = vmul.f32 %v318, %v347
      %v355 = vmul.f32 %v319, %v347
      %v356 = vmul.f32 %v320, %v347
      %v357 = vmul.f32 %v321, %v347
      %v358 = vmul.f32 %v322, %v347
      %v359 = vmul.f32 %v323, %v347
      %v360 = vmul.f32 %v324, %v347
      %v361 = vmul.f32 %v325, %v347
      %v362 = vmul.f32 %v326, %v347
      %v363 = vmul.f32 %v327, %v347
      %v364 = vmul.f32 %v328, %v347
      %v365 = vmul.f32 %v329, %v347
      %v366 = vmul.f32 %v330, %v347
      %v367 = vmul.f32 %v331, %v347
      %v368 = vmul.f32 %v332, %v347
      %v369 = vmul.f32 %v333, %v347
      %v370 = vmul.f32 %v334, %v347
      %v371 = vmul.f32 %v335, %v347
      %v372 = vmul.f32 %v336, %v347
      %v373 = vmul.f32 %v337, %v347
      %v374 = vmul.f32 %v338, %v347
      %v375 = vmul.f32 %v339, %v347
      %v376 = vmul.f32 %v340, %v347
      %v377 = vmul.f32 %v341, %v347
      %v378 = vmul.f32 %v342, %v347
      %v379 = vmul.f32 %v343, %v347
      %v380 = vmul.f32 %v344, %v347
      %v381 = vld [vmem:[%s2] sm:$0x1]
      %v383 = vperm.slane %v381, 0
      %v385 = vadd.f32 %v349, %v383
      %v386 = vadd.f32 %v350, %v383
      %v387 = vadd.f32 %v351, %v383
      %v388 = vadd.f32 %v352, %v383
      %v389 = vadd.f32 %v353, %v383
      %v390 = vadd.f32 %v354, %v383
      %v391 = vadd.f32 %v355, %v383
      %v392 = vadd.f32 %v356, %v383
      %v393 = vadd.f32 %v357, %v383
      %v394 = vadd.f32 %v358, %v383
      %v395 = vadd.f32 %v359, %v383
      %v396 = vadd.f32 %v360, %v383
      %v397 = vadd.f32 %v361, %v383
      %v398 = vadd.f32 %v362, %v383
      %v399 = vadd.f32 %v363, %v383
      %v400 = vadd.f32 %v364, %v383
      %v401 = vadd.f32 %v365, %v383
      %v402 = vadd.f32 %v366, %v383
      %v403 = vadd.f32 %v367, %v383
      %v404 = vadd.f32 %v368, %v383
      %v405 = vadd.f32 %v369, %v383
      %v406 = vadd.f32 %v370, %v383
      %v407 = vadd.f32 %v371, %v383
      %v408 = vadd.f32 %v372, %v383
      %v409 = vadd.f32 %v373, %v383
      %v410 = vadd.f32 %v374, %v383
      %v411 = vadd.f32 %v375, %v383
      %v412 = vadd.f32 %v376, %v383
      %v413 = vadd.f32 %v377, %v383
      %v414 = vadd.f32 %v378, %v383
      %v415 = vadd.f32 %v379, %v383
      %v416 = vadd.f32 %v380, %v383
      %v417 = vmax.f32 %v385, 0.0
      %v418 = vmax.f32 %v386, 0.0
      %v419 = vmax.f32 %v387, 0.0
      %v420 = vmax.f32 %v388, 0.0
      %v421 = vmax.f32 %v389, 0.0
      %v422 = vmax.f32 %v390, 0.0
      %v423 = vmax.f32 %v391, 0.0
      %v424 = vmax.f32 %v392, 0.0
      %v425 = vmax.f32 %v393, 0.0
      %v426 = vmax.f32 %v394, 0.0
      %v427 = vmax.f32 %v395, 0.0
      %v428 = vmax.f32 %v396, 0.0
      %v429 = vmax.f32 %v397, 0.0
      %v430 = vmax.f32 %v398, 0.0
      %v431 = vmax.f32 %v399, 0.0
      %v432 = vmax.f32 %v400, 0.0
      %v433 = vmax.f32 %v401, 0.0
      %v434 = vmax.f32 %v402, 0.0
      %v435 = vmax.f32 %v403, 0.0
      %v436 = vmax.f32 %v404, 0.0
      %v437 = vmax.f32 %v405, 0.0
      %v438 = vmax.f32 %v406, 0.0
      %v439 = vmax.f32 %v407, 0.0
      %v440 = vmax.f32 %v408, 0.0
      %v441 = vmax.f32 %v409, 0.0
      %v442 = vmax.f32 %v410, 0.0
      %v443 = vmax.f32 %v411, 0.0
      %v444 = vmax.f32 %v412, 0.0
      %v445 = vmax.f32 %v413, 0.0
      %v446 = vmax.f32 %v414, 0.0
      %v447 = vmax.f32 %v415, 0.0
      %v448 = vmax.f32 %v416, 0.0
      %v449 = vpack.c.bf16 %v418, %v417
      %v450 = vpack.c.bf16 %v420, %v419
      %v451 = vpack.c.bf16 %v422, %v421
      %v452 = vpack.c.bf16 %v424, %v423
      %v453 = vpack.c.bf16 %v426, %v425
      %v454 = vpack.c.bf16 %v428, %v427
      %v455 = vpack.c.bf16 %v430, %v429
      %v456 = vpack.c.bf16 %v432, %v431
      %v457 = vpack.c.bf16 %v434, %v433
      %v458 = vpack.c.bf16 %v436, %v435
      %v459 = vpack.c.bf16 %v438, %v437
      %v460 = vpack.c.bf16 %v440, %v439
      %v461 = vpack.c.bf16 %v442, %v441
      %v462 = vpack.c.bf16 %v444, %v443
      %v463 = vpack.c.bf16 %v446, %v445
      %v464 = vpack.c.bf16 %v448, %v447
      %v465 = vld [vmem:[%s3] sm:$0xf]
      %v466 = vld [vmem:[%s3 + $0x4] sm:$0x3]
      %v467 = vld [vmem:[%s4] sm:$0x1]
      %v469 = vperm.slane %v467, 0
      %v473 = vunpack.c.l.b16 %v465
      %v474 = vunpack.c.l.b16 %v466
      %v475 = vpack.c.b16 %v474, %v473
      %vm476 = vcmask 97280
      %v478 = vsel %vm476, %v449, 0
      %v481 = vsel %vm476, %v450, 0
      %v484 = vsel %vm476, %v451, 0
      %v487 = vsel %vm476, %v452, 0
      %v490 = vsel %vm476, %v453, 0
      %v493 = vsel %vm476, %v454, 0
      %v496 = vsel %vm476, %v455, 0
      %v499 = vsel %vm476, %v456, 0
      %v502 = vsel %vm476, %v457, 0
      %v505 = vsel %vm476, %v458, 0
      %v508 = vsel %vm476, %v459, 0
      %v511 = vsel %vm476, %v460, 0
      %v514 = vsel %vm476, %v461, 0
      %v517 = vsel %vm476, %v462, 0
      %v520 = vsel %vm476, %v463, 0
      %v523 = vsel %vm476, %v464, 0
      %vm525 = vcmask 1045504
      %v527 = vsel %vm525, %v475, 0
      %529 = vmatpush.bf16.msra.mxu0 0
      %530 = vmatpush.bf16.msra.mxu0 0
      %531 = vmatpush.bf16.msra.mxu0 0
      %532 = vmatpush.bf16.msra.mxu0 0
      %533 = vmatpush.bf16.msra.mxu0 0
      %534 = vmatpush.bf16.msra.mxu0 0
      %535 = vmatpush.bf16.msra.mxu0 0
      %536 = vmatpush.bf16.msra.mxu0 %v527
      %537 = vmatmul.bf16.gmra.mxu0 %v478
      %v538 = vpop.f32.mrf.mxu0
      %v539 = vadd.f32 %v469, %v538
      %v540 = vpop.f32.mrf.mxu0
      %v541 = vadd.f32 %v469, %v540
      %542 = vmatmul.bf16.gmra.mxu0 %v481
      %v543 = vpop.f32.mrf.mxu0
      %v544 = vadd.f32 %v469, %v543
      %v545 = vpop.f32.mrf.mxu0
      %v546 = vadd.f32 %v469, %v545
      %547 = vmatmul.bf16.gmra.mxu0 %v484
      %v548 = vpop.f32.mrf.mxu0
      %v549 = vadd.f32 %v469, %v548
      %v550 = vpop.f32.mrf.mxu0
      %v551 = vadd.f32 %v469, %v550
      %552 = vmatmul.bf16.gmra.mxu0 %v487
      %v553 = vpop.f32.mrf.mxu0
      %v554 = vadd.f32 %v469, %v553
      %v555 = vpop.f32.mrf.mxu0
      %v556 = vadd.f32 %v469, %v555
      %557 = vmatmul.bf16.gmra.mxu0 %v490
      %v558 = vpop.f32.mrf.mxu0
      %v559 = vadd.f32 %v469, %v558
      %v560 = vpop.f32.mrf.mxu0
      %v561 = vadd.f32 %v469, %v560
      %562 = vmatmul.bf16.gmra.mxu0 %v493
      %v563 = vpop.f32.mrf.mxu0
      %v564 = vadd.f32 %v469, %v563
      %v565 = vpop.f32.mrf.mxu0
      %v566 = vadd.f32 %v469, %v565
      %567 = vmatmul.bf16.gmra.mxu0 %v496
      %v568 = vpop.f32.mrf.mxu0
      %v569 = vadd.f32 %v469, %v568
      %v570 = vpop.f32.mrf.mxu0
      %v571 = vadd.f32 %v469, %v570
      %572 = vmatmul.bf16.gmra.mxu0 %v499
      %v573 = vpop.f32.mrf.mxu0
      %v574 = vadd.f32 %v469, %v573
      %v575 = vpop.f32.mrf.mxu0
      %v576 = vadd.f32 %v469, %v575
      %577 = vmatmul.bf16.gmra.mxu0 %v502
      %v578 = vpop.f32.mrf.mxu0
      %v579 = vadd.f32 %v469, %v578
      %v580 = vpop.f32.mrf.mxu0
      %v581 = vadd.f32 %v469, %v580
      %582 = vmatmul.bf16.gmra.mxu0 %v505
      %v583 = vpop.f32.mrf.mxu0
      %v584 = vadd.f32 %v469, %v583
      %v585 = vpop.f32.mrf.mxu0
      %v586 = vadd.f32 %v469, %v585
      %587 = vmatmul.bf16.gmra.mxu0 %v508
      %v588 = vpop.f32.mrf.mxu0
      %v589 = vadd.f32 %v469, %v588
      %v590 = vpop.f32.mrf.mxu0
      %v591 = vadd.f32 %v469, %v590
      %592 = vmatmul.bf16.gmra.mxu0 %v511
      %v593 = vpop.f32.mrf.mxu0
      %v594 = vadd.f32 %v469, %v593
      %v595 = vpop.f32.mrf.mxu0
      %v596 = vadd.f32 %v469, %v595
      %597 = vmatmul.bf16.gmra.mxu0 %v514
      %v598 = vpop.f32.mrf.mxu0
      %v599 = vadd.f32 %v469, %v598
      %v600 = vpop.f32.mrf.mxu0
      %v601 = vadd.f32 %v469, %v600
      %602 = vmatmul.bf16.gmra.mxu0 %v517
      %v603 = vpop.f32.mrf.mxu0
      %v604 = vadd.f32 %v469, %v603
      %v605 = vpop.f32.mrf.mxu0
      %v606 = vadd.f32 %v469, %v605
      %607 = vmatmul.bf16.gmra.mxu0 %v520
      %v608 = vpop.f32.mrf.mxu0
      %v609 = vadd.f32 %v469, %v608
      %v610 = vpop.f32.mrf.mxu0
      %v611 = vadd.f32 %v469, %v610
      %612 = vmatmul.bf16.gmra.mxu0 %v523
      %v613 = vpop.f32.mrf.mxu0
      %v614 = vadd.f32 %v469, %v613
      %v615 = vpop.f32.mrf.mxu0
      %v616 = vadd.f32 %v469, %v615
      %617 = vdwg.mxu0
      %v618 = vmax.f32 %v539, 0.0
      %v619 = vmax.f32 %v541, 0.0
      %v620 = vmax.f32 %v544, 0.0
      %v621 = vmax.f32 %v546, 0.0
      %v622 = vmax.f32 %v549, 0.0
      %v623 = vmax.f32 %v551, 0.0
      %v624 = vmax.f32 %v554, 0.0
      %v625 = vmax.f32 %v556, 0.0
      %v626 = vmax.f32 %v559, 0.0
      %v627 = vmax.f32 %v561, 0.0
      %v628 = vmax.f32 %v564, 0.0
      %v629 = vmax.f32 %v566, 0.0
      %v630 = vmax.f32 %v569, 0.0
      %v631 = vmax.f32 %v571, 0.0
      %v632 = vmax.f32 %v574, 0.0
      %v633 = vmax.f32 %v576, 0.0
      %v634 = vmax.f32 %v579, 0.0
      %v635 = vmax.f32 %v581, 0.0
      %v636 = vmax.f32 %v584, 0.0
      %v637 = vmax.f32 %v586, 0.0
      %v638 = vmax.f32 %v589, 0.0
      %v639 = vmax.f32 %v591, 0.0
      %v640 = vmax.f32 %v594, 0.0
      %v641 = vmax.f32 %v596, 0.0
      %v642 = vmax.f32 %v599, 0.0
      %v643 = vmax.f32 %v601, 0.0
      %v644 = vmax.f32 %v604, 0.0
      %v645 = vmax.f32 %v606, 0.0
      %v646 = vmax.f32 %v609, 0.0
      %v647 = vmax.f32 %v611, 0.0
      %v648 = vmax.f32 %v614, 0.0
      %v649 = vmax.f32 %v616, 0.0
      %s650 = scalar_lea.vmem [#allocation2], 24
      %vm651 = vcmask 64512
      %652 = vst.msk [vmem:[%s650 + $0x1] sm:$0xff] %vm651, %v618
      %653 = vst.msk [vmem:[%s650 + $0x9] sm:$0xff] %vm651, %v619
      %654 = vst.msk [vmem:[%s650 + $0x19] sm:$0xff] %vm651, %v620
      %655 = vst.msk [vmem:[%s650 + $0x21] sm:$0xff] %vm651, %v621
      %656 = vst.msk [vmem:[%s650 + $0x31] sm:$0xff] %vm651, %v622
      %657 = vst.msk [vmem:[%s650 + $0x39] sm:$0xff] %vm651, %v623
      %658 = vst.msk [vmem:[%s650 + $0x49] sm:$0xff] %vm651, %v624
      %659 = vst.msk [vmem:[%s650 + $0x51] sm:$0xff] %vm651, %v625
      %660 = vst.msk [vmem:[%s650 + $0x61] sm:$0xff] %vm651, %v626
      %661 = vst.msk [vmem:[%s650 + $0x69] sm:$0xff] %vm651, %v627
      %662 = vst.msk [vmem:[%s650 + $0x79] sm:$0xff] %vm651, %v628
      %663 = vst.msk [vmem:[%s650 + $0x81] sm:$0xff] %vm651, %v629
      %664 = vst.msk [vmem:[%s650 + $0x91] sm:$0xff] %vm651, %v630
      %665 = vst.msk [vmem:[%s650 + $0x99] sm:$0xff] %vm651, %v631
      %666 = vst.msk [vmem:[%s650 + $0xa9] sm:$0xff] %vm651, %v632
      %667 = vst.msk [vmem:[%s650 + $0xb1] sm:$0xff] %vm651, %v633
      %668 = vst.msk [vmem:[%s650 + $0xc1] sm:$0xff] %vm651, %v634
      %669 = vst.msk [vmem:[%s650 + $0xc9] sm:$0xff] %vm651, %v635
      %670 = vst.msk [vmem:[%s650 + $0xd9] sm:$0xff] %vm651, %v636
      %671 = vst.msk [vmem:[%s650 + $0xe1] sm:$0xff] %vm651, %v637
      %672 = vst.msk [vmem:[%s650 + $0xf1] sm:$0xff] %vm651, %v638
      %673 = vst.msk [vmem:[%s650 + $0xf9] sm:$0xff] %vm651, %v639
      %674 = vst.msk [vmem:[%s650 + $0x109] sm:$0xff] %vm651, %v640
      %675 = vst.msk [vmem:[%s650 + $0x111] sm:$0xff] %vm651, %v641
      %676 = vst.msk [vmem:[%s650 + $0x121] sm:$0xff] %vm651, %v642
      %677 = vst.msk [vmem:[%s650 + $0x129] sm:$0xff] %vm651, %v643
      %678 = vst.msk [vmem:[%s650 + $0x139] sm:$0xff] %vm651, %v644
      %679 = vst.msk [vmem:[%s650 + $0x141] sm:$0xff] %vm651, %v645
      %680 = vst.msk [vmem:[%s650 + $0x151] sm:$0xff] %vm651, %v646
      %681 = vst.msk [vmem:[%s650 + $0x159] sm:$0xff] %vm651, %v647
      %682 = vst.msk [vmem:[%s650 + $0x169] sm:$0xff] %vm651, %v648
      %683 = vst.msk [vmem:[%s650 + $0x171] sm:$0xff] %vm651, %v649
      %v684 = vld [vmem:[#allocation2] sm:$0xff]
      %v685 = vld [vmem:[#allocation2 + $0x8] sm:$0xff]
      %v686 = vld [vmem:[#allocation2 + $0x18] sm:$0xff]
      %v687 = vld [vmem:[#allocation2 + $0x20] sm:$0xff]
      %v688 = vld [vmem:[#allocation2 + $0x30] sm:$0xff]
      %v689 = vld [vmem:[#allocation2 + $0x38] sm:$0xff]
      %v690 = vld [vmem:[#allocation2 + $0x48] sm:$0xff]
      %v691 = vld [vmem:[#allocation2 + $0x50] sm:$0xff]
      %v692 = vld [vmem:[#allocation2 + $0x60] sm:$0xff]
      %v693 = vld [vmem:[#allocation2 + $0x68] sm:$0xff]
      %v694 = vld [vmem:[#allocation2 + $0x78] sm:$0xff]
      %v695 = vld [vmem:[#allocation2 + $0x80] sm:$0xff]
      %v696 = vld [vmem:[#allocation2 + $0x90] sm:$0xff]
      %v697 = vld [vmem:[#allocation2 + $0x98] sm:$0xff]
      %v698 = vld [vmem:[#allocation2 + $0xa8] sm:$0xff]
      %v699 = vld [vmem:[#allocation2 + $0xb0] sm:$0xff]
      %v700 = vld [vmem:[#allocation2 + $0xc0] sm:$0xff]
      %v701 = vld [vmem:[#allocation2 + $0xc8] sm:$0xff]
      %v702 = vld [vmem:[#allocation2 + $0xd8] sm:$0xff]
      %v703 = vld [vmem:[#allocation2 + $0xe0] sm:$0xff]
      %v704 = vld [vmem:[#allocation2 + $0xf0] sm:$0xff]
      %v705 = vld [vmem:[#allocation2 + $0xf8] sm:$0xff]
      %v706 = vld [vmem:[#allocation2 + $0x108] sm:$0xff]
      %v707 = vld [vmem:[#allocation2 + $0x110] sm:$0xff]
      %v708 = vld [vmem:[#allocation2 + $0x120] sm:$0xff]
      %v709 = vld [vmem:[#allocation2 + $0x128] sm:$0xff]
      %v710 = vld [vmem:[#allocation2 + $0x138] sm:$0xff]
      %v711 = vld [vmem:[#allocation2 + $0x140] sm:$0xff]
      %v712 = vld [vmem:[#allocation2 + $0x150] sm:$0xff]
      %v713 = vld [vmem:[#allocation2 + $0x158] sm:$0xff]
      %v714 = vld [vmem:[#allocation2 + $0x168] sm:$0xff]
      %v715 = vld [vmem:[#allocation2 + $0x170] sm:$0xff]
      %v716 = vpack.c.bf16 %v685, %v684
      %v717 = vpack.c.bf16 %v687, %v686
      %v718 = vpack.c.bf16 %v689, %v688
      %v719 = vpack.c.bf16 %v691, %v690
      %v720 = vpack.c.bf16 %v693, %v692
      %v721 = vpack.c.bf16 %v695, %v694
      %v722 = vpack.c.bf16 %v697, %v696
      %v723 = vpack.c.bf16 %v699, %v698
      %v724 = vpack.c.bf16 %v701, %v700
      %v725 = vpack.c.bf16 %v703, %v702
      %v726 = vpack.c.bf16 %v705, %v704
      %v727 = vpack.c.bf16 %v707, %v706
      %v728 = vpack.c.bf16 %v709, %v708
      %v729 = vpack.c.bf16 %v711, %v710
      %v730 = vpack.c.bf16 %v713, %v712
      %v731 = vpack.c.bf16 %v715, %v714
      %v732 = vld [vmem:[%s5] sm:$0xf]
      %v733 = vld [vmem:[#allocation2 + $0x1] sm:$0xff]
      %v734 = vld [vmem:[#allocation2 + $0x9] sm:$0xff]
      %v735 = vld [vmem:[#allocation2 + $0x19] sm:$0xff]
      %v736 = vld [vmem:[#allocation2 + $0x21] sm:$0xff]
      %v737 = vld [vmem:[#allocation2 + $0x31] sm:$0xff]
      %v738 = vld [vmem:[#allocation2 + $0x39] sm:$0xff]
      %v739 = vld [vmem:[#allocation2 + $0x49] sm:$0xff]
      %v740 = vld [vmem:[#allocation2 + $0x51] sm:$0xff]
      %v741 = vld [vmem:[#allocation2 + $0x61] sm:$0xff]
      %v742 = vld [vmem:[#allocation2 + $0x69] sm:$0xff]
      %v743 = vld [vmem:[#allocation2 + $0x79] sm:$0xff]
      %v744 = vld [vmem:[#allocation2 + $0x81] sm:$0xff]
      %v745 = vld [vmem:[#allocation2 + $0x91] sm:$0xff]
      %v746 = vld [vmem:[#allocation2 + $0x99] sm:$0xff]
      %v747 = vld [vmem:[#allocation2 + $0xa9] sm:$0xff]
      %v748 = vld [vmem:[#allocation2 + $0xb1] sm:$0xff]
      %v749 = vld [vmem:[#allocation2 + $0xc1] sm:$0xff]
      %v750 = vld [vmem:[#allocation2 + $0xc9] sm:$0xff]
      %v751 = vld [vmem:[#allocation2 + $0xd9] sm:$0xff]
      %v752 = vld [vmem:[#allocation2 + $0xe1] sm:$0xff]
      %v753 = vld [vmem:[#allocation2 + $0xf1] sm:$0xff]
      %v754 = vld [vmem:[#allocation2 + $0xf9] sm:$0xff]
      %v755 = vld [vmem:[#allocation2 + $0x109] sm:$0xff]
      %v756 = vld [vmem:[#allocation2 + $0x111] sm:$0xff]
      %v757 = vld [vmem:[#allocation2 + $0x121] sm:$0xff]
      %v758 = vld [vmem:[#allocation2 + $0x129] sm:$0xff]
      %v759 = vld [vmem:[#allocation2 + $0x139] sm:$0xff]
      %v760 = vld [vmem:[#allocation2 + $0x141] sm:$0xff]
      %v761 = vld [vmem:[#allocation2 + $0x151] sm:$0xff]
      %v762 = vld [vmem:[#allocation2 + $0x159] sm:$0xff]
      %v763 = vld [vmem:[#allocation2 + $0x169] sm:$0xff]
      %v764 = vld [vmem:[#allocation2 + $0x171] sm:$0xff]
      %v765 = vpack.c.bf16 %v734, %v733
      %v766 = vpack.c.bf16 %v736, %v735
      %v767 = vpack.c.bf16 %v738, %v737
      %v768 = vpack.c.bf16 %v740, %v739
      %v769 = vpack.c.bf16 %v742, %v741
      %v770 = vpack.c.bf16 %v744, %v743
      %v771 = vpack.c.bf16 %v746, %v745
      %v772 = vpack.c.bf16 %v748, %v747
      %v773 = vpack.c.bf16 %v750, %v749
      %v774 = vpack.c.bf16 %v752, %v751
      %v775 = vpack.c.bf16 %v754, %v753
      %v776 = vpack.c.bf16 %v756, %v755
      %v777 = vpack.c.bf16 %v758, %v757
      %v778 = vpack.c.bf16 %v760, %v759
      %v779 = vpack.c.bf16 %v762, %v761
      %v780 = vpack.c.bf16 %v764, %v763
      %s781 = scalar_lea.vmem %s5, 4
      %v782 = vld [vmem:[%s781] sm:$0xf]
      %v784 = vsel %vm651, %v765, 0
      %v787 = vsel %vm651, %v766, 0
      %v790 = vsel %vm651, %v767, 0
      %v793 = vsel %vm651, %v768, 0
      %v796 = vsel %vm651, %v769, 0
      %v799 = vsel %vm651, %v770, 0
      %v802 = vsel %vm651, %v771, 0
      %v805 = vsel %vm651, %v772, 0
      %v808 = vsel %vm651, %v773, 0
      %v811 = vsel %vm651, %v774, 0
      %v814 = vsel %vm651, %v775, 0
      %v817 = vsel %vm651, %v776, 0
      %v820 = vsel %vm651, %v777, 0
      %v823 = vsel %vm651, %v778, 0
      %v826 = vsel %vm651, %v779, 0
      %v829 = vsel %vm651, %v780, 0
      %vm831 = vcmask 1043456
      %v833 = vsel %vm831, %v782, 0
      %835 = vmatpush.bf16.msra.mxu0 0
      %836 = vmatpush.bf16.msra.mxu0 0
      %837 = vmatpush.bf16.msra.mxu0 0
      %838 = vmatpush.bf16.msra.mxu0 0
      %839 = vmatpush.bf16.msra.mxu0 0
      %840 = vmatpush.bf16.msra.mxu0 0
      %841 = vmatpush.bf16.msra.mxu0 0
      %842 = vmatpush.bf16.msra.mxu0 %v833
      %843 = vmatmul.bf16.gmra.mxu0 %v784
      %v844 = vpop.f32.mrf.mxu0
      %v845 = vadd.f32 0.0, %v844
      %v846 = vpop.f32.mrf.mxu0
      %v847 = vadd.f32 0.0, %v846
      %848 = vmatmul.bf16.gmra.mxu0 %v787
      %v849 = vpop.f32.mrf.mxu0
      %v850 = vadd.f32 0.0, %v849
      %v851 = vpop.f32.mrf.mxu0
      %v852 = vadd.f32 0.0, %v851
      %853 = vmatmul.bf16.gmra.mxu0 %v790
      %v854 = vpop.f32.mrf.mxu0
      %v855 = vadd.f32 0.0, %v854
      %v856 = vpop.f32.mrf.mxu0
      %v857 = vadd.f32 0.0, %v856
      %858 = vmatmul.bf16.gmra.mxu0 %v793
      %v859 = vpop.f32.mrf.mxu0
      %v860 = vadd.f32 0.0, %v859
      %v861 = vpop.f32.mrf.mxu0
      %v862 = vadd.f32 0.0, %v861
      %863 = vmatmul.bf16.gmra.mxu0 %v796
      %v864 = vpop.f32.mrf.mxu0
      %v865 = vadd.f32 0.0, %v864
      %v866 = vpop.f32.mrf.mxu0
      %v867 = vadd.f32 0.0, %v866
      %868 = vmatmul.bf16.gmra.mxu0 %v799
      %v869 = vpop.f32.mrf.mxu0
      %v870 = vadd.f32 0.0, %v869
      %v871 = vpop.f32.mrf.mxu0
      %v872 = vadd.f32 0.0, %v871
      %873 = vmatmul.bf16.gmra.mxu0 %v802
      %v874 = vpop.f32.mrf.mxu0
      %v875 = vadd.f32 0.0, %v874
      %v876 = vpop.f32.mrf.mxu0
      %v877 = vadd.f32 0.0, %v876
      %878 = vmatmul.bf16.gmra.mxu0 %v805
      %v879 = vpop.f32.mrf.mxu0
      %v880 = vadd.f32 0.0, %v879
      %v881 = vpop.f32.mrf.mxu0
      %v882 = vadd.f32 0.0, %v881
      %883 = vmatmul.bf16.gmra.mxu0 %v808
      %v884 = vpop.f32.mrf.mxu0
      %v885 = vadd.f32 0.0, %v884
      %v886 = vpop.f32.mrf.mxu0
      %v887 = vadd.f32 0.0, %v886
      %888 = vmatmul.bf16.gmra.mxu0 %v811
      %v889 = vpop.f32.mrf.mxu0
      %v890 = vadd.f32 0.0, %v889
      %v891 = vpop.f32.mrf.mxu0
      %v892 = vadd.f32 0.0, %v891
      %893 = vmatmul.bf16.gmra.mxu0 %v814
      %v894 = vpop.f32.mrf.mxu0
      %v895 = vadd.f32 0.0, %v894
      %v896 = vpop.f32.mrf.mxu0
      %v897 = vadd.f32 0.0, %v896
      %898 = vmatmul.bf16.gmra.mxu0 %v817
      %v899 = vpop.f32.mrf.mxu0
      %v900 = vadd.f32 0.0, %v899
      %v901 = vpop.f32.mrf.mxu0
      %v902 = vadd.f32 0.0, %v901
      %903 = vmatmul.bf16.gmra.mxu0 %v820
      %v904 = vpop.f32.mrf.mxu0
      %v905 = vadd.f32 0.0, %v904
      %v906 = vpop.f32.mrf.mxu0
      %v907 = vadd.f32 0.0, %v906
      %908 = vmatmul.bf16.gmra.mxu0 %v823
      %v909 = vpop.f32.mrf.mxu0
      %v910 = vadd.f32 0.0, %v909
      %v911 = vpop.f32.mrf.mxu0
      %v912 = vadd.f32 0.0, %v911
      %913 = vmatmul.bf16.gmra.mxu0 %v826
      %v914 = vpop.f32.mrf.mxu0
      %v915 = vadd.f32 0.0, %v914
      %v916 = vpop.f32.mrf.mxu0
      %v917 = vadd.f32 0.0, %v916
      %918 = vmatmul.bf16.gmra.mxu0 %v829
      %v919 = vpop.f32.mrf.mxu0
      %v920 = vadd.f32 0.0, %v919
      %v921 = vpop.f32.mrf.mxu0
      %v922 = vadd.f32 0.0, %v921
      %923 = vdwg.mxu0
      %v925 = vsel %vm651, %v716, 0
      %v928 = vsel %vm651, %v717, 0
      %v931 = vsel %vm651, %v718, 0
      %v934 = vsel %vm651, %v719, 0
      %v937 = vsel %vm651, %v720, 0
      %v940 = vsel %vm651, %v721, 0
      %v943 = vsel %vm651, %v722, 0
      %v946 = vsel %vm651, %v723, 0
      %v949 = vsel %vm651, %v724, 0
      %v952 = vsel %vm651, %v725, 0
      %v955 = vsel %vm651, %v726, 0
      %v958 = vsel %vm651, %v727, 0
      %v961 = vsel %vm651, %v728, 0
      %v964 = vsel %vm651, %v729, 0
      %v967 = vsel %vm651, %v730, 0
      %v970 = vsel %vm651, %v731, 0
      %v973 = vsel %vm831, %v732, 0
      %975 = vmatpush.bf16.msra.mxu0 0
      %976 = vmatpush.bf16.msra.mxu0 0
      %977 = vmatpush.bf16.msra.mxu0 0
      %978 = vmatpush.bf16.msra.mxu0 0
      %979 = vmatpush.bf16.msra.mxu0 0
      %980 = vmatpush.bf16.msra.mxu0 0
      %981 = vmatpush.bf16.msra.mxu0 0
      %982 = vmatpush.bf16.msra.mxu0 %v973
      %983 = vmatmul.bf16.gmra.mxu0 %v925
      %v984 = vpop.f32.mrf.mxu0
      %v985 = vadd.f32 %v845, %v984
      %v986 = vpop.f32.mrf.mxu0
      %v987 = vadd.f32 %v847, %v986
      %988 = vmatmul.bf16.gmra.mxu0 %v928
      %v989 = vpop.f32.mrf.mxu0
      %v990 = vadd.f32 %v850, %v989
      %v991 = vpop.f32.mrf.mxu0
      %v992 = vadd.f32 %v852, %v991
      %993 = vmatmul.bf16.gmra.mxu0 %v931
      %v994 = vpop.f32.mrf.mxu0
      %v995 = vadd.f32 %v855, %v994
      %v996 = vpop.f32.mrf.mxu0
      %v997 = vadd.f32 %v857, %v996
      %998 = vmatmul.bf16.gmra.mxu0 %v934
      %v999 = vpop.f32.mrf.mxu0
      %v1000 = vadd.f32 %v860, %v999
      %v1001 = vpop.f32.mrf.mxu0
      %v1002 = vadd.f32 %v862, %v1001
      %1003 = vmatmul.bf16.gmra.mxu0 %v937
      %v1004 = vpop.f32.mrf.mxu0
      %v1005 = vadd.f32 %v865, %v1004
      %v1006 = vpop.f32.mrf.mxu0
      %v1007 = vadd.f32 %v867, %v1006
      %1008 = vmatmul.bf16.gmra.mxu0 %v940
      %v1009 = vpop.f32.mrf.mxu0
      %v1010 = vadd.f32 %v870, %v1009
      %v1011 = vpop.f32.mrf.mxu0
      %v1012 = vadd.f32 %v872, %v1011
      %1013 = vmatmul.bf16.gmra.mxu0 %v943
      %v1014 = vpop.f32.mrf.mxu0
      %v1015 = vadd.f32 %v875, %v1014
      %v1016 = vpop.f32.mrf.mxu0
      %v1017 = vadd.f32 %v877, %v1016
      %1018 = vmatmul.bf16.gmra.mxu0 %v946
      %v1019 = vpop.f32.mrf.mxu0
      %v1020 = vadd.f32 %v880, %v1019
      %v1021 = vpop.f32.mrf.mxu0
      %v1022 = vadd.f32 %v882, %v1021
      %1023 = vmatmul.bf16.gmra.mxu0 %v949
      %v1024 = vpop.f32.mrf.mxu0
      %v1025 = vadd.f32 %v885, %v1024
      %v1026 = vpop.f32.mrf.mxu0
      %v1027 = vadd.f32 %v887, %v1026
      %1028 = vmatmul.bf16.gmra.mxu0 %v952
      %v1029 = vpop.f32.mrf.mxu0
      %v1030 = vadd.f32 %v890, %v1029
      %v1031 = vpop.f32.mrf.mxu0
      %v1032 = vadd.f32 %v892, %v1031
      %1033 = vmatmul.bf16.gmra.mxu0 %v955
      %v1034 = vpop.f32.mrf.mxu0
      %v1035 = vadd.f32 %v895, %v1034
      %v1036 = vpop.f32.mrf.mxu0
      %v1037 = vadd.f32 %v897, %v1036
      %1038 = vmatmul.bf16.gmra.mxu0 %v958
      %v1039 = vpop.f32.mrf.mxu0
      %v1040 = vadd.f32 %v900, %v1039
      %v1041 = vpop.f32.mrf.mxu0
      %v1042 = vadd.f32 %v902, %v1041
      %1043 = vmatmul.bf16.gmra.mxu0 %v961
      %v1044 = vpop.f32.mrf.mxu0
      %v1045 = vadd.f32 %v905, %v1044
      %v1046 = vpop.f32.mrf.mxu0
      %v1047 = vadd.f32 %v907, %v1046
      %1048 = vmatmul.bf16.gmra.mxu0 %v964
      %v1049 = vpop.f32.mrf.mxu0
      %v1050 = vadd.f32 %v910, %v1049
      %v1051 = vpop.f32.mrf.mxu0
      %v1052 = vadd.f32 %v912, %v1051
      %1053 = vmatmul.bf16.gmra.mxu0 %v967
      %v1054 = vpop.f32.mrf.mxu0
      %v1055 = vadd.f32 %v915, %v1054
      %v1056 = vpop.f32.mrf.mxu0
      %v1057 = vadd.f32 %v917, %v1056
      %1058 = vmatmul.bf16.gmra.mxu0 %v970
      %v1059 = vpop.f32.mrf.mxu0
      %v1060 = vadd.f32 %v920, %v1059
      %v1061 = vpop.f32.mrf.mxu0
      %v1062 = vadd.f32 %v922, %v1061
      %1063 = vdwg.mxu0
      %v1064 = vld [vmem:[#allocation2 + $0x2] sm:$0xff]
      %v1065 = vld [vmem:[#allocation2 + $0xa] sm:$0xff]
      %v1066 = vld [vmem:[#allocation2 + $0x1a] sm:$0xff]
      %v1067 = vld [vmem:[#allocation2 + $0x22] sm:$0xff]
      %v1068 = vld [vmem:[#allocation2 + $0x32] sm:$0xff]
      %v1069 = vld [vmem:[#allocation2 + $0x3a] sm:$0xff]
      %v1070 = vld [vmem:[#allocation2 + $0x4a] sm:$0xff]
      %v1071 = vld [vmem:[#allocation2 + $0x52] sm:$0xff]
      %v1072 = vld [vmem:[#allocation2 + $0x62] sm:$0xff]
      %v1073 = vld [vmem:[#allocation2 + $0x6a] sm:$0xff]
      %v1074 = vld [vmem:[#allocation2 + $0x7a] sm:$0xff]
      %v1075 = vld [vmem:[#allocation2 + $0x82] sm:$0xff]
      %v1076 = vld [vmem:[#allocation2 + $0x92] sm:$0xff]
      %v1077 = vld [vmem:[#allocation2 + $0x9a] sm:$0xff]
      %v1078 = vld [vmem:[#allocation2 + $0xaa] sm:$0xff]
      %v1079 = vld [vmem:[#allocation2 + $0xb2] sm:$0xff]
      %v1080 = vld [vmem:[#allocation2 + $0xc2] sm:$0xff]
      %v1081 = vld [vmem:[#allocation2 + $0xca] sm:$0xff]
      %v1082 = vld [vmem:[#allocation2 + $0xda] sm:$0xff]
      %v1083 = vld [vmem:[#allocation2 + $0xe2] sm:$0xff]
      %v1084 = vld [vmem:[#allocation2 + $0xf2] sm:$0xff]
      %v1085 = vld [vmem:[#allocation2 + $0xfa] sm:$0xff]
      %v1086 = vld [vmem:[#allocation2 + $0x10a] sm:$0xff]
      %v1087 = vld [vmem:[#allocation2 + $0x112] sm:$0xff]
      %v1088 = vld [vmem:[#allocation2 + $0x122] sm:$0xff]
      %v1089 = vld [vmem:[#allocation2 + $0x12a] sm:$0xff]
      %v1090 = vld [vmem:[#allocation2 + $0x13a] sm:$0xff]
      %v1091 = vld [vmem:[#allocation2 + $0x142] sm:$0xff]
      %v1092 = vld [vmem:[#allocation2 + $0x152] sm:$0xff]
      %v1093 = vld [vmem:[#allocation2 + $0x15a] sm:$0xff]
      %v1094 = vld [vmem:[#allocation2 + $0x16a] sm:$0xff]
      %v1095 = vld [vmem:[#allocation2 + $0x172] sm:$0xff]
      %v1096 = vpack.c.bf16 %v1065, %v1064
      %v1097 = vpack.c.bf16 %v1067, %v1066
      %v1098 = vpack.c.bf16 %v1069, %v1068
      %v1099 = vpack.c.bf16 %v1071, %v1070
      %v1100 = vpack.c.bf16 %v1073, %v1072
      %v1101 = vpack.c.bf16 %v1075, %v1074
      %v1102 = vpack.c.bf16 %v1077, %v1076
      %v1103 = vpack.c.bf16 %v1079, %v1078
      %v1104 = vpack.c.bf16 %v1081, %v1080
      %v1105 = vpack.c.bf16 %v1083, %v1082
      %v1106 = vpack.c.bf16 %v1085, %v1084
      %v1107 = vpack.c.bf16 %v1087, %v1086
      %v1108 = vpack.c.bf16 %v1089, %v1088
      %v1109 = vpack.c.bf16 %v1091, %v1090
      %v1110 = vpack.c.bf16 %v1093, %v1092
      %v1111 = vpack.c.bf16 %v1095, %v1094
      %s1112 = scalar_lea.vmem %s5, 8
      %v1113 = vld [vmem:[%s1112] sm:$0xf]
      %v1115 = vsel %vm651, %v1096, 0
      %v1118 = vsel %vm651, %v1097, 0
      %v1121 = vsel %vm651, %v1098, 0
      %v1124 = vsel %vm651, %v1099, 0
      %v1127 = vsel %vm651, %v1100, 0
      %v1130 = vsel %vm651, %v1101, 0
      %v1133 = vsel %vm651, %v1102, 0
      %v1136 = vsel %vm651, %v1103, 0
      %v1139 = vsel %vm651, %v1104, 0
      %v1142 = vsel %vm651, %v1105, 0
      %v1145 = vsel %vm651, %v1106, 0
      %v1148 = vsel %vm651, %v1107, 0
      %v1151 = vsel %vm651, %v1108, 0
      %v1154 = vsel %vm651, %v1109, 0
      %v1157 = vsel %vm651, %v1110, 0
      %v1160 = vsel %vm651, %v1111, 0
      %v1163 = vsel %vm831, %v1113, 0
      %1165 = vmatpush.bf16.msra.mxu0 0
      %1166 = vmatpush.bf16.msra.mxu0 0
      %1167 = vmatpush.bf16.msra.mxu0 0
      %1168 = vmatpush.bf16.msra.mxu0 0
      %1169 = vmatpush.bf16.msra.mxu0 0
      %1170 = vmatpush.bf16.msra.mxu0 0
      %1171 = vmatpush.bf16.msra.mxu0 0
      %1172 = vmatpush.bf16.msra.mxu0 %v1163
      %1173 = vmatmul.bf16.gmra.mxu0 %v1115
      %v1174 = vpop.f32.mrf.mxu0
      %v1175 = vadd.f32 0.0, %v1174
      %v1176 = vpop.f32.mrf.mxu0
      %v1177 = vadd.f32 0.0, %v1176
      %1178 = vmatmul.bf16.gmra.mxu0 %v1118
      %v1179 = vpop.f32.mrf.mxu0
      %v1180 = vadd.f32 0.0, %v1179
      %v1181 = vpop.f32.mrf.mxu0
      %v1182 = vadd.f32 0.0, %v1181
      %1183 = vmatmul.bf16.gmra.mxu0 %v1121
      %v1184 = vpop.f32.mrf.mxu0
      %v1185 = vadd.f32 0.0, %v1184
      %v1186 = vpop.f32.mrf.mxu0
      %v1187 = vadd.f32 0.0, %v1186
      %1188 = vmatmul.bf16.gmra.mxu0 %v1124
      %v1189 = vpop.f32.mrf.mxu0
      %v1190 = vadd.f32 0.0, %v1189
      %v1191 = vpop.f32.mrf.mxu0
      %v1192 = vadd.f32 0.0, %v1191
      %1193 = vmatmul.bf16.gmra.mxu0 %v1127
      %v1194 = vpop.f32.mrf.mxu0
      %v1195 = vadd.f32 0.0, %v1194
      %v1196 = vpop.f32.mrf.mxu0
      %v1197 = vadd.f32 0.0, %v1196
      %1198 = vmatmul.bf16.gmra.mxu0 %v1130
      %v1199 = vpop.f32.mrf.mxu0
      %v1200 = vadd.f32 0.0, %v1199
      %v1201 = vpop.f32.mrf.mxu0
      %v1202 = vadd.f32 0.0, %v1201
      %1203 = vmatmul.bf16.gmra.mxu0 %v1133
      %v1204 = vpop.f32.mrf.mxu0
      %v1205 = vadd.f32 0.0, %v1204
      %v1206 = vpop.f32.mrf.mxu0
      %v1207 = vadd.f32 0.0, %v1206
      %1208 = vmatmul.bf16.gmra.mxu0 %v1136
      %v1209 = vpop.f32.mrf.mxu0
      %v1210 = vadd.f32 0.0, %v1209
      %v1211 = vpop.f32.mrf.mxu0
      %v1212 = vadd.f32 0.0, %v1211
      %1213 = vmatmul.bf16.gmra.mxu0 %v1139
      %v1214 = vpop.f32.mrf.mxu0
      %v1215 = vadd.f32 0.0, %v1214
      %v1216 = vpop.f32.mrf.mxu0
      %v1217 = vadd.f32 0.0, %v1216
      %1218 = vmatmul.bf16.gmra.mxu0 %v1142
      %v1219 = vpop.f32.mrf.mxu0
      %v1220 = vadd.f32 0.0, %v1219
      %v1221 = vpop.f32.mrf.mxu0
      %v1222 = vadd.f32 0.0, %v1221
      %1223 = vmatmul.bf16.gmra.mxu0 %v1145
      %v1224 = vpop.f32.mrf.mxu0
      %v1225 = vadd.f32 0.0, %v1224
      %v1226 = vpop.f32.mrf.mxu0
      %v1227 = vadd.f32 0.0, %v1226
      %1228 = vmatmul.bf16.gmra.mxu0 %v1148
      %v1229 = vpop.f32.mrf.mxu0
      %v1230 = vadd.f32 0.0, %v1229
      %v1231 = vpop.f32.mrf.mxu0
      %v1232 = vadd.f32 0.0, %v1231
      %1233 = vmatmul.bf16.gmra.mxu0 %v1151
      %v1234 = vpop.f32.mrf.mxu0
      %v1235 = vadd.f32 0.0, %v1234
      %v1236 = vpop.f32.mrf.mxu0
      %v1237 = vadd.f32 0.0, %v1236
      %1238 = vmatmul.bf16.gmra.mxu0 %v1154
      %v1239 = vpop.f32.mrf.mxu0
      %v1240 = vadd.f32 0.0, %v1239
      %v1241 = vpop.f32.mrf.mxu0
      %v1242 = vadd.f32 0.0, %v1241
      %1243 = vmatmul.bf16.gmra.mxu0 %v1157
      %v1244 = vpop.f32.mrf.mxu0
      %v1245 = vadd.f32 0.0, %v1244
      %v1246 = vpop.f32.mrf.mxu0
      %v1247 = vadd.f32 0.0, %v1246
      %1248 = vmatmul.bf16.gmra.mxu0 %v1160
      %v1249 = vpop.f32.mrf.mxu0
      %v1250 = vadd.f32 0.0, %v1249
      %v1251 = vpop.f32.mrf.mxu0
      %v1252 = vadd.f32 0.0, %v1251
      %1253 = vdwg.mxu0
      %v1254 = vadd.f32 %v985, %v1175
      %v1255 = vadd.f32 %v987, %v1177
      %v1256 = vadd.f32 %v990, %v1180
      %v1257 = vadd.f32 %v992, %v1182
      %v1258 = vadd.f32 %v995, %v1185
      %v1259 = vadd.f32 %v997, %v1187
      %v1260 = vadd.f32 %v1000, %v1190
      %v1261 = vadd.f32 %v1002, %v1192
      %v1262 = vadd.f32 %v1005, %v1195
      %v1263 = vadd.f32 %v1007, %v1197
      %v1264 = vadd.f32 %v1010, %v1200
      %v1265 = vadd.f32 %v1012, %v1202
      %v1266 = vadd.f32 %v1015, %v1205
      %v1267 = vadd.f32 %v1017, %v1207
      %v1268 = vadd.f32 %v1020, %v1210
      %v1269 = vadd.f32 %v1022, %v1212
      %v1270 = vadd.f32 %v1025, %v1215
      %v1271 = vadd.f32 %v1027, %v1217
      %v1272 = vadd.f32 %v1030, %v1220
      %v1273 = vadd.f32 %v1032, %v1222
      %v1274 = vadd.f32 %v1035, %v1225
      %v1275 = vadd.f32 %v1037, %v1227
      %v1276 = vadd.f32 %v1040, %v1230
      %v1277 = vadd.f32 %v1042, %v1232
      %v1278 = vadd.f32 %v1045, %v1235
      %v1279 = vadd.f32 %v1047, %v1237
      %v1280 = vadd.f32 %v1050, %v1240
      %v1281 = vadd.f32 %v1052, %v1242
      %v1282 = vadd.f32 %v1055, %v1245
      %v1283 = vadd.f32 %v1057, %v1247
      %v1284 = vadd.f32 %v1060, %v1250
      %v1285 = vadd.f32 %v1062, %v1252
      %v1286 = vld [vmem:[%s650] sm:$0xff]
      %v1287 = vld [vmem:[%s650 + $0x8] sm:$0xff]
      %v1288 = vld [vmem:[%s650 + $0x18] sm:$0xff]
      %v1289 = vld [vmem:[%s650 + $0x20] sm:$0xff]
      %v1290 = vld [vmem:[%s650 + $0x30] sm:$0xff]
      %v1291 = vld [vmem:[%s650 + $0x38] sm:$0xff]
      %v1292 = vld [vmem:[%s650 + $0x48] sm:$0xff]
      %v1293 = vld [vmem:[%s650 + $0x50] sm:$0xff]
      %v1294 = vld [vmem:[%s650 + $0x60] sm:$0xff]
      %v1295 = vld [vmem:[%s650 + $0x68] sm:$0xff]
      %v1296 = vld [vmem:[%s650 + $0x78] sm:$0xff]
      %v1297 = vld [vmem:[%s650 + $0x80] sm:$0xff]
      %v1298 = vld [vmem:[%s650 + $0x90] sm:$0xff]
      %v1299 = vld [vmem:[%s650 + $0x98] sm:$0xff]
      %v1300 = vld [vmem:[%s650 + $0xa8] sm:$0xff]
      %v1301 = vld [vmem:[%s650 + $0xb0] sm:$0xff]
      %v1302 = vld [vmem:[%s650 + $0xc0] sm:$0xff]
      %v1303 = vld [vmem:[%s650 + $0xc8] sm:$0xff]
      %v1304 = vld [vmem:[%s650 + $0xd8] sm:$0xff]
      %v1305 = vld [vmem:[%s650 + $0xe0] sm:$0xff]
      %v1306 = vld [vmem:[%s650 + $0xf0] sm:$0xff]
      %v1307 = vld [vmem:[%s650 + $0xf8] sm:$0xff]
      %v1308 = vld [vmem:[%s650 + $0x108] sm:$0xff]
      %v1309 = vld [vmem:[%s650 + $0x110] sm:$0xff]
      %v1310 = vld [vmem:[%s650 + $0x120] sm:$0xff]
      %v1311 = vld [vmem:[%s650 + $0x128] sm:$0xff]
      %v1312 = vld [vmem:[%s650 + $0x138] sm:$0xff]
      %v1313 = vld [vmem:[%s650 + $0x140] sm:$0xff]
      %v1314 = vld [vmem:[%s650 + $0x150] sm:$0xff]
      %v1315 = vld [vmem:[%s650 + $0x158] sm:$0xff]
      %v1316 = vld [vmem:[%s650 + $0x168] sm:$0xff]
      %v1317 = vld [vmem:[%s650 + $0x170] sm:$0xff]
      %v1318 = vpack.c.bf16 %v1287, %v1286
      %v1319 = vpack.c.bf16 %v1289, %v1288
      %v1320 = vpack.c.bf16 %v1291, %v1290
      %v1321 = vpack.c.bf16 %v1293, %v1292
      %v1322 = vpack.c.bf16 %v1295, %v1294
      %v1323 = vpack.c.bf16 %v1297, %v1296
      %v1324 = vpack.c.bf16 %v1299, %v1298
      %v1325 = vpack.c.bf16 %v1301, %v1300
      %v1326 = vpack.c.bf16 %v1303, %v1302
      %v1327 = vpack.c.bf16 %v1305, %v1304
      %v1328 = vpack.c.bf16 %v1307, %v1306
      %v1329 = vpack.c.bf16 %v1309, %v1308
      %v1330 = vpack.c.bf16 %v1311, %v1310
      %v1331 = vpack.c.bf16 %v1313, %v1312
      %v1332 = vpack.c.bf16 %v1315, %v1314
      %v1333 = vpack.c.bf16 %v1317, %v1316
      %s1334 = scalar_lea.vmem %s5, 12
      %v1335 = vld [vmem:[%s1334] sm:$0xf]
      %v1337 = vsel %vm651, %v1318, 0
      %v1340 = vsel %vm651, %v1319, 0
      %v1343 = vsel %vm651, %v1320, 0
      %v1346 = vsel %vm651, %v1321, 0
      %v1349 = vsel %vm651, %v1322, 0
      %v1352 = vsel %vm651, %v1323, 0
      %v1355 = vsel %vm651, %v1324, 0
      %v1358 = vsel %vm651, %v1325, 0
      %v1361 = vsel %vm651, %v1326, 0
      %v1364 = vsel %vm651, %v1327, 0
      %v1367 = vsel %vm651, %v1328, 0
      %v1370 = vsel %vm651, %v1329, 0
      %v1373 = vsel %vm651, %v1330, 0
      %v1376 = vsel %vm651, %v1331, 0
      %v1379 = vsel %vm651, %v1332, 0
      %v1382 = vsel %vm651, %v1333, 0
      %v1385 = vsel %vm831, %v1335, 0
      %1387 = vmatpush.bf16.msra.mxu0 0
      %1388 = vmatpush.bf16.msra.mxu0 0
      %1389 = vmatpush.bf16.msra.mxu0 0
      %1390 = vmatpush.bf16.msra.mxu0 0
      %1391 = vmatpush.bf16.msra.mxu0 0
      %1392 = vmatpush.bf16.msra.mxu0 0
      %1393 = vmatpush.bf16.msra.mxu0 0
      %1394 = vmatpush.bf16.msra.mxu0 %v1385
      %1395 = vmatmul.bf16.gmra.mxu0 %v1337
      %v1396 = vpop.f32.mrf.mxu0
      %v1397 = vadd.f32 0.0, %v1396
      %v1398 = vpop.f32.mrf.mxu0
      %v1399 = vadd.f32 0.0, %v1398
      %1400 = vmatmul.bf16.gmra.mxu0 %v1340
      %v1401 = vpop.f32.mrf.mxu0
      %v1402 = vadd.f32 0.0, %v1401
      %v1403 = vpop.f32.mrf.mxu0
      %v1404 = vadd.f32 0.0, %v1403
      %1405 = vmatmul.bf16.gmra.mxu0 %v1343
      %v1406 = vpop.f32.mrf.mxu0
      %v1407 = vadd.f32 0.0, %v1406
      %v1408 = vpop.f32.mrf.mxu0
      %v1409 = vadd.f32 0.0, %v1408
      %1410 = vmatmul.bf16.gmra.mxu0 %v1346
      %v1411 = vpop.f32.mrf.mxu0
      %v1412 = vadd.f32 0.0, %v1411
      %v1413 = vpop.f32.mrf.mxu0
      %v1414 = vadd.f32 0.0, %v1413
      %1415 = vmatmul.bf16.gmra.mxu0 %v1349
      %v1416 = vpop.f32.mrf.mxu0
      %v1417 = vadd.f32 0.0, %v1416
      %v1418 = vpop.f32.mrf.mxu0
      %v1419 = vadd.f32 0.0, %v1418
      %1420 = vmatmul.bf16.gmra.mxu0 %v1352
      %v1421 = vpop.f32.mrf.mxu0
      %v1422 = vadd.f32 0.0, %v1421
      %v1423 = vpop.f32.mrf.mxu0
      %v1424 = vadd.f32 0.0, %v1423
      %1425 = vmatmul.bf16.gmra.mxu0 %v1355
      %v1426 = vpop.f32.mrf.mxu0
      %v1427 = vadd.f32 0.0, %v1426
      %v1428 = vpop.f32.mrf.mxu0
      %v1429 = vadd.f32 0.0, %v1428
      %1430 = vmatmul.bf16.gmra.mxu0 %v1358
      %v1431 = vpop.f32.mrf.mxu0
      %v1432 = vadd.f32 0.0, %v1431
      %v1433 = vpop.f32.mrf.mxu0
      %v1434 = vadd.f32 0.0, %v1433
      %1435 = vmatmul.bf16.gmra.mxu0 %v1361
      %v1436 = vpop.f32.mrf.mxu0
      %v1437 = vadd.f32 0.0, %v1436
      %v1438 = vpop.f32.mrf.mxu0
      %v1439 = vadd.f32 0.0, %v1438
      %1440 = vmatmul.bf16.gmra.mxu0 %v1364
      %v1441 = vpop.f32.mrf.mxu0
      %v1442 = vadd.f32 0.0, %v1441
      %v1443 = vpop.f32.mrf.mxu0
      %v1444 = vadd.f32 0.0, %v1443
      %1445 = vmatmul.bf16.gmra.mxu0 %v1367
      %v1446 = vpop.f32.mrf.mxu0
      %v1447 = vadd.f32 0.0, %v1446
      %v1448 = vpop.f32.mrf.mxu0
      %v1449 = vadd.f32 0.0, %v1448
      %1450 = vmatmul.bf16.gmra.mxu0 %v1370
      %v1451 = vpop.f32.mrf.mxu0
      %v1452 = vadd.f32 0.0, %v1451
      %v1453 = vpop.f32.mrf.mxu0
      %v1454 = vadd.f32 0.0, %v1453
      %1455 = vmatmul.bf16.gmra.mxu0 %v1373
      %v1456 = vpop.f32.mrf.mxu0
      %v1457 = vadd.f32 0.0, %v1456
      %v1458 = vpop.f32.mrf.mxu0
      %v1459 = vadd.f32 0.0, %v1458
      %1460 = vmatmul.bf16.gmra.mxu0 %v1376
      %v1461 = vpop.f32.mrf.mxu0
      %v1462 = vadd.f32 0.0, %v1461
      %v1463 = vpop.f32.mrf.mxu0
      %v1464 = vadd.f32 0.0, %v1463
      %1465 = vmatmul.bf16.gmra.mxu0 %v1379
      %v1466 = vpop.f32.mrf.mxu0
      %v1467 = vadd.f32 0.0, %v1466
      %v1468 = vpop.f32.mrf.mxu0
      %v1469 = vadd.f32 0.0, %v1468
      %1470 = vmatmul.bf16.gmra.mxu0 %v1382
      %v1471 = vpop.f32.mrf.mxu0
      %v1472 = vadd.f32 0.0, %v1471
      %v1473 = vpop.f32.mrf.mxu0
      %v1474 = vadd.f32 0.0, %v1473
      %1475 = vdwg.mxu0
      %v1476 = vadd.f32 %v1254, %v1397
      %v1477 = vadd.f32 %v1255, %v1399
      %v1478 = vadd.f32 %v1256, %v1402
      %v1479 = vadd.f32 %v1257, %v1404
      %v1480 = vadd.f32 %v1258, %v1407
      %v1481 = vadd.f32 %v1259, %v1409
      %v1482 = vadd.f32 %v1260, %v1412
      %v1483 = vadd.f32 %v1261, %v1414
      %v1484 = vadd.f32 %v1262, %v1417
      %v1485 = vadd.f32 %v1263, %v1419
      %v1486 = vadd.f32 %v1264, %v1422
      %v1487 = vadd.f32 %v1265, %v1424
      %v1488 = vadd.f32 %v1266, %v1427
      %v1489 = vadd.f32 %v1267, %v1429
      %v1490 = vadd.f32 %v1268, %v1432
      %v1491 = vadd.f32 %v1269, %v1434
      %v1492 = vadd.f32 %v1270, %v1437
      %v1493 = vadd.f32 %v1271, %v1439
      %v1494 = vadd.f32 %v1272, %v1442
      %v1495 = vadd.f32 %v1273, %v1444
      %v1496 = vadd.f32 %v1274, %v1447
      %v1497 = vadd.f32 %v1275, %v1449
      %v1498 = vadd.f32 %v1276, %v1452
      %v1499 = vadd.f32 %v1277, %v1454
      %v1500 = vadd.f32 %v1278, %v1457
      %v1501 = vadd.f32 %v1279, %v1459
      %v1502 = vadd.f32 %v1280, %v1462
      %v1503 = vadd.f32 %v1281, %v1464
      %v1504 = vadd.f32 %v1282, %v1467
      %v1505 = vadd.f32 %v1283, %v1469
      %v1506 = vadd.f32 %v1284, %v1472
      %v1507 = vadd.f32 %v1285, %v1474
      %v1508 = vld [vmem:[%s650 + $0x1] sm:$0xff]
      %v1509 = vld [vmem:[%s650 + $0x9] sm:$0xff]
      %v1510 = vld [vmem:[%s650 + $0x19] sm:$0xff]
      %v1511 = vld [vmem:[%s650 + $0x21] sm:$0xff]
      %v1512 = vld [vmem:[%s650 + $0x31] sm:$0xff]
      %v1513 = vld [vmem:[%s650 + $0x39] sm:$0xff]
      %v1514 = vld [vmem:[%s650 + $0x49] sm:$0xff]
      %v1515 = vld [vmem:[%s650 + $0x51] sm:$0xff]
      %v1516 = vld [vmem:[%s650 + $0x61] sm:$0xff]
      %v1517 = vld [vmem:[%s650 + $0x69] sm:$0xff]
      %v1518 = vld [vmem:[%s650 + $0x79] sm:$0xff]
      %v1519 = vld [vmem:[%s650 + $0x81] sm:$0xff]
      %v1520 = vld [vmem:[%s650 + $0x91] sm:$0xff]
      %v1521 = vld [vmem:[%s650 + $0x99] sm:$0xff]
      %v1522 = vld [vmem:[%s650 + $0xa9] sm:$0xff]
      %v1523 = vld [vmem:[%s650 + $0xb1] sm:$0xff]
      %v1524 = vld [vmem:[%s650 + $0xc1] sm:$0xff]
      %v1525 = vld [vmem:[%s650 + $0xc9] sm:$0xff]
      %v1526 = vld [vmem:[%s650 + $0xd9] sm:$0xff]
      %v1527 = vld [vmem:[%s650 + $0xe1] sm:$0xff]
      %v1528 = vld [vmem:[%s650 + $0xf1] sm:$0xff]
      %v1529 = vld [vmem:[%s650 + $0xf9] sm:$0xff]
      %v1530 = vld [vmem:[%s650 + $0x109] sm:$0xff]
      %v1531 = vld [vmem:[%s650 + $0x111] sm:$0xff]
      %v1532 = vld [vmem:[%s650 + $0x121] sm:$0xff]
      %v1533 = vld [vmem:[%s650 + $0x129] sm:$0xff]
      %v1534 = vld [vmem:[%s650 + $0x139] sm:$0xff]
      %v1535 = vld [vmem:[%s650 + $0x141] sm:$0xff]
      %v1536 = vld [vmem:[%s650 + $0x151] sm:$0xff]
      %v1537 = vld [vmem:[%s650 + $0x159] sm:$0xff]
      %v1538 = vld [vmem:[%s650 + $0x169] sm:$0xff]
      %v1539 = vld [vmem:[%s650 + $0x171] sm:$0xff]
      %v1540 = vpack.c.bf16 %v1509, %v1508
      %v1541 = vpack.c.bf16 %v1511, %v1510
      %v1542 = vpack.c.bf16 %v1513, %v1512
      %v1543 = vpack.c.bf16 %v1515, %v1514
      %v1544 = vpack.c.bf16 %v1517, %v1516
      %v1545 = vpack.c.bf16 %v1519, %v1518
      %v1546 = vpack.c.bf16 %v1521, %v1520
      %v1547 = vpack.c.bf16 %v1523, %v1522
      %v1548 = vpack.c.bf16 %v1525, %v1524
      %v1549 = vpack.c.bf16 %v1527, %v1526
      %v1550 = vpack.c.bf16 %v1529, %v1528
      %v1551 = vpack.c.bf16 %v1531, %v1530
      %v1552 = vpack.c.bf16 %v1533, %v1532
      %v1553 = vpack.c.bf16 %v1535, %v1534
      %v1554 = vpack.c.bf16 %v1537, %v1536
      %v1555 = vpack.c.bf16 %v1539, %v1538
      %s1556 = scalar_lea.vmem %s5, 16
      %v1557 = vld [vmem:[%s1556] sm:$0xf]
      %v1559 = vsel %vm651, %v1540, 0
      %v1562 = vsel %vm651, %v1541, 0
      %v1565 = vsel %vm651, %v1542, 0
      %v1568 = vsel %vm651, %v1543, 0
      %v1571 = vsel %vm651, %v1544, 0
      %v1574 = vsel %vm651, %v1545, 0
      %v1577 = vsel %vm651, %v1546, 0
      %v1580 = vsel %vm651, %v1547, 0
      %v1583 = vsel %vm651, %v1548, 0
      %v1586 = vsel %vm651, %v1549, 0
      %v1589 = vsel %vm651, %v1550, 0
      %v1592 = vsel %vm651, %v1551, 0
      %v1595 = vsel %vm651, %v1552, 0
      %v1598 = vsel %vm651, %v1553, 0
      %v1601 = vsel %vm651, %v1554, 0
      %v1604 = vsel %vm651, %v1555, 0
      %v1607 = vsel %vm831, %v1557, 0
      %1609 = vmatpush.bf16.msra.mxu0 0
      %1610 = vmatpush.bf16.msra.mxu0 0
      %1611 = vmatpush.bf16.msra.mxu0 0
      %1612 = vmatpush.bf16.msra.mxu0 0
      %1613 = vmatpush.bf16.msra.mxu0 0
      %1614 = vmatpush.bf16.msra.mxu0 0
      %1615 = vmatpush.bf16.msra.mxu0 0
      %1616 = vmatpush.bf16.msra.mxu0 %v1607
      %1617 = vmatmul.bf16.gmra.mxu0 %v1559
      %v1618 = vpop.f32.mrf.mxu0
      %v1619 = vadd.f32 0.0, %v1618
      %v1620 = vpop.f32.mrf.mxu0
      %v1621 = vadd.f32 0.0, %v1620
      %1622 = vmatmul.bf16.gmra.mxu0 %v1562
      %v1623 = vpop.f32.mrf.mxu0
      %v1624 = vadd.f32 0.0, %v1623
      %v1625 = vpop.f32.mrf.mxu0
      %v1626 = vadd.f32 0.0, %v1625
      %1627 = vmatmul.bf16.gmra.mxu0 %v1565
      %v1628 = vpop.f32.mrf.mxu0
      %v1629 = vadd.f32 0.0, %v1628
      %v1630 = vpop.f32.mrf.mxu0
      %v1631 = vadd.f32 0.0, %v1630
      %1632 = vmatmul.bf16.gmra.mxu0 %v1568
      %v1633 = vpop.f32.mrf.mxu0
      %v1634 = vadd.f32 0.0, %v1633
      %v1635 = vpop.f32.mrf.mxu0
      %v1636 = vadd.f32 0.0, %v1635
      %1637 = vmatmul.bf16.gmra.mxu0 %v1571
      %v1638 = vpop.f32.mrf.mxu0
      %v1639 = vadd.f32 0.0, %v1638
      %v1640 = vpop.f32.mrf.mxu0
      %v1641 = vadd.f32 0.0, %v1640
      %1642 = vmatmul.bf16.gmra.mxu0 %v1574
      %v1643 = vpop.f32.mrf.mxu0
      %v1644 = vadd.f32 0.0, %v1643
      %v1645 = vpop.f32.mrf.mxu0
      %v1646 = vadd.f32 0.0, %v1645
      %1647 = vmatmul.bf16.gmra.mxu0 %v1577
      %v1648 = vpop.f32.mrf.mxu0
      %v1649 = vadd.f32 0.0, %v1648
      %v1650 = vpop.f32.mrf.mxu0
      %v1651 = vadd.f32 0.0, %v1650
      %1652 = vmatmul.bf16.gmra.mxu0 %v1580
      %v1653 = vpop.f32.mrf.mxu0
      %v1654 = vadd.f32 0.0, %v1653
      %v1655 = vpop.f32.mrf.mxu0
      %v1656 = vadd.f32 0.0, %v1655
      %1657 = vmatmul.bf16.gmra.mxu0 %v1583
      %v1658 = vpop.f32.mrf.mxu0
      %v1659 = vadd.f32 0.0, %v1658
      %v1660 = vpop.f32.mrf.mxu0
      %v1661 = vadd.f32 0.0, %v1660
      %1662 = vmatmul.bf16.gmra.mxu0 %v1586
      %v1663 = vpop.f32.mrf.mxu0
      %v1664 = vadd.f32 0.0, %v1663
      %v1665 = vpop.f32.mrf.mxu0
      %v1666 = vadd.f32 0.0, %v1665
      %1667 = vmatmul.bf16.gmra.mxu0 %v1589
      %v1668 = vpop.f32.mrf.mxu0
      %v1669 = vadd.f32 0.0, %v1668
      %v1670 = vpop.f32.mrf.mxu0
      %v1671 = vadd.f32 0.0, %v1670
      %1672 = vmatmul.bf16.gmra.mxu0 %v1592
      %v1673 = vpop.f32.mrf.mxu0
      %v1674 = vadd.f32 0.0, %v1673
      %v1675 = vpop.f32.mrf.mxu0
      %v1676 = vadd.f32 0.0, %v1675
      %1677 = vmatmul.bf16.gmra.mxu0 %v1595
      %v1678 = vpop.f32.mrf.mxu0
      %v1679 = vadd.f32 0.0, %v1678
      %v1680 = vpop.f32.mrf.mxu0
      %v1681 = vadd.f32 0.0, %v1680
      %1682 = vmatmul.bf16.gmra.mxu0 %v1598
      %v1683 = vpop.f32.mrf.mxu0
      %v1684 = vadd.f32 0.0, %v1683
      %v1685 = vpop.f32.mrf.mxu0
      %v1686 = vadd.f32 0.0, %v1685
      %1687 = vmatmul.bf16.gmra.mxu0 %v1601
      %v1688 = vpop.f32.mrf.mxu0
      %v1689 = vadd.f32 0.0, %v1688
      %v1690 = vpop.f32.mrf.mxu0
      %v1691 = vadd.f32 0.0, %v1690
      %1692 = vmatmul.bf16.gmra.mxu0 %v1604
      %v1693 = vpop.f32.mrf.mxu0
      %v1694 = vadd.f32 0.0, %v1693
      %v1695 = vpop.f32.mrf.mxu0
      %v1696 = vadd.f32 0.0, %v1695
      %1697 = vdwg.mxu0
      %v1698 = vadd.f32 %v1476, %v1619
      %v1699 = vadd.f32 %v1477, %v1621
      %v1700 = vadd.f32 %v1478, %v1624
      %v1701 = vadd.f32 %v1479, %v1626
      %v1702 = vadd.f32 %v1480, %v1629
      %v1703 = vadd.f32 %v1481, %v1631
      %v1704 = vadd.f32 %v1482, %v1634
      %v1705 = vadd.f32 %v1483, %v1636
      %v1706 = vadd.f32 %v1484, %v1639
      %v1707 = vadd.f32 %v1485, %v1641
      %v1708 = vadd.f32 %v1486, %v1644
      %v1709 = vadd.f32 %v1487, %v1646
      %v1710 = vadd.f32 %v1488, %v1649
      %v1711 = vadd.f32 %v1489, %v1651
      %v1712 = vadd.f32 %v1490, %v1654
      %v1713 = vadd.f32 %v1491, %v1656
      %v1714 = vadd.f32 %v1492, %v1659
      %v1715 = vadd.f32 %v1493, %v1661
      %v1716 = vadd.f32 %v1494, %v1664
      %v1717 = vadd.f32 %v1495, %v1666
      %v1718 = vadd.f32 %v1496, %v1669
      %v1719 = vadd.f32 %v1497, %v1671
      %v1720 = vadd.f32 %v1498, %v1674
      %v1721 = vadd.f32 %v1499, %v1676
      %v1722 = vadd.f32 %v1500, %v1679
      %v1723 = vadd.f32 %v1501, %v1681
      %v1724 = vadd.f32 %v1502, %v1684
      %v1725 = vadd.f32 %v1503, %v1686
      %v1726 = vadd.f32 %v1504, %v1689
      %v1727 = vadd.f32 %v1505, %v1691
      %v1728 = vadd.f32 %v1506, %v1694
      %v1729 = vadd.f32 %v1507, %v1696
      %v1730 = vld [vmem:[%s650 + $0x2] sm:$0xff]
      %v1731 = vld [vmem:[%s650 + $0xa] sm:$0xff]
      %v1732 = vld [vmem:[%s650 + $0x1a] sm:$0xff]
      %v1733 = vld [vmem:[%s650 + $0x22] sm:$0xff]
      %v1734 = vld [vmem:[%s650 + $0x32] sm:$0xff]
      %v1735 = vld [vmem:[%s650 + $0x3a] sm:$0xff]
      %v1736 = vld [vmem:[%s650 + $0x4a] sm:$0xff]
      %v1737 = vld [vmem:[%s650 + $0x52] sm:$0xff]
      %v1738 = vld [vmem:[%s650 + $0x62] sm:$0xff]
      %v1739 = vld [vmem:[%s650 + $0x6a] sm:$0xff]
      %v1740 = vld [vmem:[%s650 + $0x7a] sm:$0xff]
      %v1741 = vld [vmem:[%s650 + $0x82] sm:$0xff]
      %v1742 = vld [vmem:[%s650 + $0x92] sm:$0xff]
      %v1743 = vld [vmem:[%s650 + $0x9a] sm:$0xff]
      %v1744 = vld [vmem:[%s650 + $0xaa] sm:$0xff]
      %v1745 = vld [vmem:[%s650 + $0xb2] sm:$0xff]
      %v1746 = vld [vmem:[%s650 + $0xc2] sm:$0xff]
      %v1747 = vld [vmem:[%s650 + $0xca] sm:$0xff]
      %v1748 = vld [vmem:[%s650 + $0xda] sm:$0xff]
      %v1749 = vld [vmem:[%s650 + $0xe2] sm:$0xff]
      %v1750 = vld [vmem:[%s650 + $0xf2] sm:$0xff]
      %v1751 = vld [vmem:[%s650 + $0xfa] sm:$0xff]
      %v1752 = vld [vmem:[%s650 + $0x10a] sm:$0xff]
      %v1753 = vld [vmem:[%s650 + $0x112] sm:$0xff]
      %v1754 = vld [vmem:[%s650 + $0x122] sm:$0xff]
      %v1755 = vld [vmem:[%s650 + $0x12a] sm:$0xff]
      %v1756 = vld [vmem:[%s650 + $0x13a] sm:$0xff]
      %v1757 = vld [vmem:[%s650 + $0x142] sm:$0xff]
      %v1758 = vld [vmem:[%s650 + $0x152] sm:$0xff]
      %v1759 = vld [vmem:[%s650 + $0x15a] sm:$0xff]
      %v1760 = vld [vmem:[%s650 + $0x16a] sm:$0xff]
      %v1761 = vld [vmem:[%s650 + $0x172] sm:$0xff]
      %v1762 = vpack.c.bf16 %v1731, %v1730
      %v1763 = vpack.c.bf16 %v1733, %v1732
      %v1764 = vpack.c.bf16 %v1735, %v1734
      %v1765 = vpack.c.bf16 %v1737, %v1736
      %v1766 = vpack.c.bf16 %v1739, %v1738
      %v1767 = vpack.c.bf16 %v1741, %v1740
      %v1768 = vpack.c.bf16 %v1743, %v1742
      %v1769 = vpack.c.bf16 %v1745, %v1744
      %v1770 = vpack.c.bf16 %v1747, %v1746
      %v1771 = vpack.c.bf16 %v1749, %v1748
      %v1772 = vpack.c.bf16 %v1751, %v1750
      %v1773 = vpack.c.bf16 %v1753, %v1752
      %v1774 = vpack.c.bf16 %v1755, %v1754
      %v1775 = vpack.c.bf16 %v1757, %v1756
      %v1776 = vpack.c.bf16 %v1759, %v1758
      %v1777 = vpack.c.bf16 %v1761, %v1760
      %s1778 = scalar_lea.vmem %s5, 20
      %v1779 = vld [vmem:[%s1778] sm:$0xf]
      %v1781 = vsel %vm651, %v1762, 0
      %v1784 = vsel %vm651, %v1763, 0
      %v1787 = vsel %vm651, %v1764, 0
      %v1790 = vsel %vm651, %v1765, 0
      %v1793 = vsel %vm651, %v1766, 0
      %v1796 = vsel %vm651, %v1767, 0
      %v1799 = vsel %vm651, %v1768, 0
      %v1802 = vsel %vm651, %v1769, 0
      %v1805 = vsel %vm651, %v1770, 0
      %v1808 = vsel %vm651, %v1771, 0
      %v1811 = vsel %vm651, %v1772, 0
      %v1814 = vsel %vm651, %v1773, 0
      %v1817 = vsel %vm651, %v1774, 0
      %v1820 = vsel %vm651, %v1775, 0
      %v1823 = vsel %vm651, %v1776, 0
      %v1826 = vsel %vm651, %v1777, 0
      %v1829 = vsel %vm831, %v1779, 0
      %1831 = vmatpush.bf16.msra.mxu0 0
      %1832 = vmatpush.bf16.msra.mxu0 0
      %1833 = vmatpush.bf16.msra.mxu0 0
      %1834 = vmatpush.bf16.msra.mxu0 0
      %1835 = vmatpush.bf16.msra.mxu0 0
      %1836 = vmatpush.bf16.msra.mxu0 0
      %1837 = vmatpush.bf16.msra.mxu0 0
      %1838 = vmatpush.bf16.msra.mxu0 %v1829
      %1839 = vmatmul.bf16.gmra.mxu0 %v1781
      %v1840 = vpop.f32.mrf.mxu0
      %v1841 = vadd.f32 0.0, %v1840
      %v1842 = vpop.f32.mrf.mxu0
      %v1843 = vadd.f32 0.0, %v1842
      %1844 = vmatmul.bf16.gmra.mxu0 %v1784
      %v1845 = vpop.f32.mrf.mxu0
      %v1846 = vadd.f32 0.0, %v1845
      %v1847 = vpop.f32.mrf.mxu0
      %v1848 = vadd.f32 0.0, %v1847
      %1849 = vmatmul.bf16.gmra.mxu0 %v1787
      %v1850 = vpop.f32.mrf.mxu0
      %v1851 = vadd.f32 0.0, %v1850
      %v1852 = vpop.f32.mrf.mxu0
      %v1853 = vadd.f32 0.0, %v1852
      %1854 = vmatmul.bf16.gmra.mxu0 %v1790
      %v1855 = vpop.f32.mrf.mxu0
      %v1856 = vadd.f32 0.0, %v1855
      %v1857 = vpop.f32.mrf.mxu0
      %v1858 = vadd.f32 0.0, %v1857
      %1859 = vmatmul.bf16.gmra.mxu0 %v1793
      %v1860 = vpop.f32.mrf.mxu0
      %v1861 = vadd.f32 0.0, %v1860
      %v1862 = vpop.f32.mrf.mxu0
      %v1863 = vadd.f32 0.0, %v1862
      %1864 = vmatmul.bf16.gmra.mxu0 %v1796
      %v1865 = vpop.f32.mrf.mxu0
      %v1866 = vadd.f32 0.0, %v1865
      %v1867 = vpop.f32.mrf.mxu0
      %v1868 = vadd.f32 0.0, %v1867
      %1869 = vmatmul.bf16.gmra.mxu0 %v1799
      %v1870 = vpop.f32.mrf.mxu0
      %v1871 = vadd.f32 0.0, %v1870
      %v1872 = vpop.f32.mrf.mxu0
      %v1873 = vadd.f32 0.0, %v1872
      %1874 = vmatmul.bf16.gmra.mxu0 %v1802
      %v1875 = vpop.f32.mrf.mxu0
      %v1876 = vadd.f32 0.0, %v1875
      %v1877 = vpop.f32.mrf.mxu0
      %v1878 = vadd.f32 0.0, %v1877
      %1879 = vmatmul.bf16.gmra.mxu0 %v1805
      %v1880 = vpop.f32.mrf.mxu0
      %v1881 = vadd.f32 0.0, %v1880
      %v1882 = vpop.f32.mrf.mxu0
      %v1883 = vadd.f32 0.0, %v1882
      %1884 = vmatmul.bf16.gmra.mxu0 %v1808
      %v1885 = vpop.f32.mrf.mxu0
      %v1886 = vadd.f32 0.0, %v1885
      %v1887 = vpop.f32.mrf.mxu0
      %v1888 = vadd.f32 0.0, %v1887
      %1889 = vmatmul.bf16.gmra.mxu0 %v1811
      %v1890 = vpop.f32.mrf.mxu0
      %v1891 = vadd.f32 0.0, %v1890
      %v1892 = vpop.f32.mrf.mxu0
      %v1893 = vadd.f32 0.0, %v1892
      %1894 = vmatmul.bf16.gmra.mxu0 %v1814
      %v1895 = vpop.f32.mrf.mxu0
      %v1896 = vadd.f32 0.0, %v1895
      %v1897 = vpop.f32.mrf.mxu0
      %v1898 = vadd.f32 0.0, %v1897
      %1899 = vmatmul.bf16.gmra.mxu0 %v1817
      %v1900 = vpop.f32.mrf.mxu0
      %v1901 = vadd.f32 0.0, %v1900
      %v1902 = vpop.f32.mrf.mxu0
      %v1903 = vadd.f32 0.0, %v1902
      %1904 = vmatmul.bf16.gmra.mxu0 %v1820
      %v1905 = vpop.f32.mrf.mxu0
      %v1906 = vadd.f32 0.0, %v1905
      %v1907 = vpop.f32.mrf.mxu0
      %v1908 = vadd.f32 0.0, %v1907
      %1909 = vmatmul.bf16.gmra.mxu0 %v1823
      %v1910 = vpop.f32.mrf.mxu0
      %v1911 = vadd.f32 0.0, %v1910
      %v1912 = vpop.f32.mrf.mxu0
      %v1913 = vadd.f32 0.0, %v1912
      %1914 = vmatmul.bf16.gmra.mxu0 %v1826
      %v1915 = vpop.f32.mrf.mxu0
      %v1916 = vadd.f32 0.0, %v1915
      %v1917 = vpop.f32.mrf.mxu0
      %v1918 = vadd.f32 0.0, %v1917
      %1919 = vdwg.mxu0
      %v1920 = vadd.f32 %v1698, %v1841
      %v1921 = vadd.f32 %v1699, %v1843
      %v1922 = vadd.f32 %v1700, %v1846
      %v1923 = vadd.f32 %v1701, %v1848
      %v1924 = vadd.f32 %v1702, %v1851
      %v1925 = vadd.f32 %v1703, %v1853
      %v1926 = vadd.f32 %v1704, %v1856
      %v1927 = vadd.f32 %v1705, %v1858
      %v1928 = vadd.f32 %v1706, %v1861
      %v1929 = vadd.f32 %v1707, %v1863
      %v1930 = vadd.f32 %v1708, %v1866
      %v1931 = vadd.f32 %v1709, %v1868
      %v1932 = vadd.f32 %v1710, %v1871
      %v1933 = vadd.f32 %v1711, %v1873
      %v1934 = vadd.f32 %v1712, %v1876
      %v1935 = vadd.f32 %v1713, %v1878
      %v1936 = vadd.f32 %v1714, %v1881
      %v1937 = vadd.f32 %v1715, %v1883
      %v1938 = vadd.f32 %v1716, %v1886
      %v1939 = vadd.f32 %v1717, %v1888
      %v1940 = vadd.f32 %v1718, %v1891
      %v1941 = vadd.f32 %v1719, %v1893
      %v1942 = vadd.f32 %v1720, %v1896
      %v1943 = vadd.f32 %v1721, %v1898
      %v1944 = vadd.f32 %v1722, %v1901
      %v1945 = vadd.f32 %v1723, %v1903
      %v1946 = vadd.f32 %v1724, %v1906
      %v1947 = vadd.f32 %v1725, %v1908
      %v1948 = vadd.f32 %v1726, %v1911
      %v1949 = vadd.f32 %v1727, %v1913
      %v1950 = vadd.f32 %v1728, %v1916
      %v1951 = vadd.f32 %v1729, %v1918
      %s1952 = scalar_lea.vmem [#allocation2], 48
      %v1953 = vld [vmem:[%s1952] sm:$0xff]
      %v1954 = vld [vmem:[%s1952 + $0x8] sm:$0xff]
      %v1955 = vld [vmem:[%s1952 + $0x18] sm:$0xff]
      %v1956 = vld [vmem:[%s1952 + $0x20] sm:$0xff]
      %v1957 = vld [vmem:[%s1952 + $0x30] sm:$0xff]
      %v1958 = vld [vmem:[%s1952 + $0x38] sm:$0xff]
      %v1959 = vld [vmem:[%s1952 + $0x48] sm:$0xff]
      %v1960 = vld [vmem:[%s1952 + $0x50] sm:$0xff]
      %v1961 = vld [vmem:[%s1952 + $0x60] sm:$0xff]
      %v1962 = vld [vmem:[%s1952 + $0x68] sm:$0xff]
      %v1963 = vld [vmem:[%s1952 + $0x78] sm:$0xff]
      %v1964 = vld [vmem:[%s1952 + $0x80] sm:$0xff]
      %v1965 = vld [vmem:[%s1952 + $0x90] sm:$0xff]
      %v1966 = vld [vmem:[%s1952 + $0x98] sm:$0xff]
      %v1967 = vld [vmem:[%s1952 + $0xa8] sm:$0xff]
      %v1968 = vld [vmem:[%s1952 + $0xb0] sm:$0xff]
      %v1969 = vld [vmem:[%s1952 + $0xc0] sm:$0xff]
      %v1970 = vld [vmem:[%s1952 + $0xc8] sm:$0xff]
      %v1971 = vld [vmem:[%s1952 + $0xd8] sm:$0xff]
      %v1972 = vld [vmem:[%s1952 + $0xe0] sm:$0xff]
      %v1973 = vld [vmem:[%s1952 + $0xf0] sm:$0xff]
      %v1974 = vld [vmem:[%s1952 + $0xf8] sm:$0xff]
      %v1975 = vld [vmem:[%s1952 + $0x108] sm:$0xff]
      %v1976 = vld [vmem:[%s1952 + $0x110] sm:$0xff]
      %v1977 = vld [vmem:[%s1952 + $0x120] sm:$0xff]
      %v1978 = vld [vmem:[%s1952 + $0x128] sm:$0xff]
      %v1979 = vld [vmem:[%s1952 + $0x138] sm:$0xff]
      %v1980 = vld [vmem:[%s1952 + $0x140] sm:$0xff]
      %v1981 = vld [vmem:[%s1952 + $0x150] sm:$0xff]
      %v1982 = vld [vmem:[%s1952 + $0x158] sm:$0xff]
      %v1983 = vld [vmem:[%s1952 + $0x168] sm:$0xff]
      %v1984 = vld [vmem:[%s1952 + $0x170] sm:$0xff]
      %v1985 = vpack.c.bf16 %v1954, %v1953
      %v1986 = vpack.c.bf16 %v1956, %v1955
      %v1987 = vpack.c.bf16 %v1958, %v1957
      %v1988 = vpack.c.bf16 %v1960, %v1959
      %v1989 = vpack.c.bf16 %v1962, %v1961
      %v1990 = vpack.c.bf16 %v1964, %v1963
      %v1991 = vpack.c.bf16 %v1966, %v1965
      %v1992 = vpack.c.bf16 %v1968, %v1967
      %v1993 = vpack.c.bf16 %v1970, %v1969
      %v1994 = vpack.c.bf16 %v1972, %v1971
      %v1995 = vpack.c.bf16 %v1974, %v1973
      %v1996 = vpack.c.bf16 %v1976, %v1975
      %v1997 = vpack.c.bf16 %v1978, %v1977
      %v1998 = vpack.c.bf16 %v1980, %v1979
      %v1999 = vpack.c.bf16 %v1982, %v1981
      %v2000 = vpack.c.bf16 %v1984, %v1983
      %s2001 = scalar_lea.vmem %s5, 24
      %v2002 = vld [vmem:[%s2001] sm:$0xf]
      %v2004 = vsel %vm651, %v1985, 0
      %v2007 = vsel %vm651, %v1986, 0
      %v2010 = vsel %vm651, %v1987, 0
      %v2013 = vsel %vm651, %v1988, 0
      %v2016 = vsel %vm651, %v1989, 0
      %v2019 = vsel %vm651, %v1990, 0
      %v2022 = vsel %vm651, %v1991, 0
      %v2025 = vsel %vm651, %v1992, 0
      %v2028 = vsel %vm651, %v1993, 0
      %v2031 = vsel %vm651, %v1994, 0
      %v2034 = vsel %vm651, %v1995, 0
      %v2037 = vsel %vm651, %v1996, 0
      %v2040 = vsel %vm651, %v1997, 0
      %v2043 = vsel %vm651, %v1998, 0
      %v2046 = vsel %vm651, %v1999, 0
      %v2049 = vsel %vm651, %v2000, 0
      %v2052 = vsel %vm831, %v2002, 0
      %2054 = vmatpush.bf16.msra.mxu0 0
      %2055 = vmatpush.bf16.msra.mxu0 0
      %2056 = vmatpush.bf16.msra.mxu0 0
      %2057 = vmatpush.bf16.msra.mxu0 0
      %2058 = vmatpush.bf16.msra.mxu0 0
      %2059 = vmatpush.bf16.msra.mxu0 0
      %2060 = vmatpush.bf16.msra.mxu0 0
      %2061 = vmatpush.bf16.msra.mxu0 %v2052
      %2062 = vmatmul.bf16.gmra.mxu0 %v2004
      %v2063 = vpop.f32.mrf.mxu0
      %v2064 = vadd.f32 0.0, %v2063
      %v2065 = vpop.f32.mrf.mxu0
      %v2066 = vadd.f32 0.0, %v2065
      %2067 = vmatmul.bf16.gmra.mxu0 %v2007
      %v2068 = vpop.f32.mrf.mxu0
      %v2069 = vadd.f32 0.0, %v2068
      %v2070 = vpop.f32.mrf.mxu0
      %v2071 = vadd.f32 0.0, %v2070
      %2072 = vmatmul.bf16.gmra.mxu0 %v2010
      %v2073 = vpop.f32.mrf.mxu0
      %v2074 = vadd.f32 0.0, %v2073
      %v2075 = vpop.f32.mrf.mxu0
      %v2076 = vadd.f32 0.0, %v2075
      %2077 = vmatmul.bf16.gmra.mxu0 %v2013
      %v2078 = vpop.f32.mrf.mxu0
      %v2079 = vadd.f32 0.0, %v2078
      %v2080 = vpop.f32.mrf.mxu0
      %v2081 = vadd.f32 0.0, %v2080
      %2082 = vmatmul.bf16.gmra.mxu0 %v2016
      %v2083 = vpop.f32.mrf.mxu0
      %v2084 = vadd.f32 0.0, %v2083
      %v2085 = vpop.f32.mrf.mxu0
      %v2086 = vadd.f32 0.0, %v2085
      %2087 = vmatmul.bf16.gmra.mxu0 %v2019
      %v2088 = vpop.f32.mrf.mxu0
      %v2089 = vadd.f32 0.0, %v2088
      %v2090 = vpop.f32.mrf.mxu0
      %v2091 = vadd.f32 0.0, %v2090
      %2092 = vmatmul.bf16.gmra.mxu0 %v2022
      %v2093 = vpop.f32.mrf.mxu0
      %v2094 = vadd.f32 0.0, %v2093
      %v2095 = vpop.f32.mrf.mxu0
      %v2096 = vadd.f32 0.0, %v2095
      %2097 = vmatmul.bf16.gmra.mxu0 %v2025
      %v2098 = vpop.f32.mrf.mxu0
      %v2099 = vadd.f32 0.0, %v2098
      %v2100 = vpop.f32.mrf.mxu0
      %v2101 = vadd.f32 0.0, %v2100
      %2102 = vmatmul.bf16.gmra.mxu0 %v2028
      %v2103 = vpop.f32.mrf.mxu0
      %v2104 = vadd.f32 0.0, %v2103
      %v2105 = vpop.f32.mrf.mxu0
      %v2106 = vadd.f32 0.0, %v2105
      %2107 = vmatmul.bf16.gmra.mxu0 %v2031
      %v2108 = vpop.f32.mrf.mxu0
      %v2109 = vadd.f32 0.0, %v2108
      %v2110 = vpop.f32.mrf.mxu0
      %v2111 = vadd.f32 0.0, %v2110
      %2112 = vmatmul.bf16.gmra.mxu0 %v2034
      %v2113 = vpop.f32.mrf.mxu0
      %v2114 = vadd.f32 0.0, %v2113
      %v2115 = vpop.f32.mrf.mxu0
      %v2116 = vadd.f32 0.0, %v2115
      %2117 = vmatmul.bf16.gmra.mxu0 %v2037
      %v2118 = vpop.f32.mrf.mxu0
      %v2119 = vadd.f32 0.0, %v2118
      %v2120 = vpop.f32.mrf.mxu0
      %v2121 = vadd.f32 0.0, %v2120
      %2122 = vmatmul.bf16.gmra.mxu0 %v2040
      %v2123 = vpop.f32.mrf.mxu0
      %v2124 = vadd.f32 0.0, %v2123
      %v2125 = vpop.f32.mrf.mxu0
      %v2126 = vadd.f32 0.0, %v2125
      %2127 = vmatmul.bf16.gmra.mxu0 %v2043
      %v2128 = vpop.f32.mrf.mxu0
      %v2129 = vadd.f32 0.0, %v2128
      %v2130 = vpop.f32.mrf.mxu0
      %v2131 = vadd.f32 0.0, %v2130
      %2132 = vmatmul.bf16.gmra.mxu0 %v2046
      %v2133 = vpop.f32.mrf.mxu0
      %v2134 = vadd.f32 0.0, %v2133
      %v2135 = vpop.f32.mrf.mxu0
      %v2136 = vadd.f32 0.0, %v2135
      %2137 = vmatmul.bf16.gmra.mxu0 %v2049
      %v2138 = vpop.f32.mrf.mxu0
      %v2139 = vadd.f32 0.0, %v2138
      %v2140 = vpop.f32.mrf.mxu0
      %v2141 = vadd.f32 0.0, %v2140
      %2142 = vdwg.mxu0
      %v2143 = vadd.f32 %v1920, %v2064
      %v2144 = vadd.f32 %v1921, %v2066
      %v2145 = vadd.f32 %v1922, %v2069
      %v2146 = vadd.f32 %v1923, %v2071
      %v2147 = vadd.f32 %v1924, %v2074
      %v2148 = vadd.f32 %v1925, %v2076
      %v2149 = vadd.f32 %v1926, %v2079
      %v2150 = vadd.f32 %v1927, %v2081
      %v2151 = vadd.f32 %v1928, %v2084
      %v2152 = vadd.f32 %v1929, %v2086
      %v2153 = vadd.f32 %v1930, %v2089
      %v2154 = vadd.f32 %v1931, %v2091
      %v2155 = vadd.f32 %v1932, %v2094
      %v2156 = vadd.f32 %v1933, %v2096
      %v2157 = vadd.f32 %v1934, %v2099
      %v2158 = vadd.f32 %v1935, %v2101
      %v2159 = vadd.f32 %v1936, %v2104
      %v2160 = vadd.f32 %v1937, %v2106
      %v2161 = vadd.f32 %v1938, %v2109
      %v2162 = vadd.f32 %v1939, %v2111
      %v2163 = vadd.f32 %v1940, %v2114
      %v2164 = vadd.f32 %v1941, %v2116
      %v2165 = vadd.f32 %v1942, %v2119
      %v2166 = vadd.f32 %v1943, %v2121
      %v2167 = vadd.f32 %v1944, %v2124
      %v2168 = vadd.f32 %v1945, %v2126
      %v2169 = vadd.f32 %v1946, %v2129
      %v2170 = vadd.f32 %v1947, %v2131
      %v2171 = vadd.f32 %v1948, %v2134
      %v2172 = vadd.f32 %v1949, %v2136
      %v2173 = vadd.f32 %v1950, %v2139
      %v2174 = vadd.f32 %v1951, %v2141
      %v2175 = vld [vmem:[%s1952 + $0x1] sm:$0xff]
      %v2176 = vld [vmem:[%s1952 + $0x9] sm:$0xff]
      %v2177 = vld [vmem:[%s1952 + $0x19] sm:$0xff]
      %v2178 = vld [vmem:[%s1952 + $0x21] sm:$0xff]
      %v2179 = vld [vmem:[%s1952 + $0x31] sm:$0xff]
      %v2180 = vld [vmem:[%s1952 + $0x39] sm:$0xff]
      %v2181 = vld [vmem:[%s1952 + $0x49] sm:$0xff]
      %v2182 = vld [vmem:[%s1952 + $0x51] sm:$0xff]
      %v2183 = vld [vmem:[%s1952 + $0x61] sm:$0xff]
      %v2184 = vld [vmem:[%s1952 + $0x69] sm:$0xff]
      %v2185 = vld [vmem:[%s1952 + $0x79] sm:$0xff]
      %v2186 = vld [vmem:[%s1952 + $0x81] sm:$0xff]
      %v2187 = vld [vmem:[%s1952 + $0x91] sm:$0xff]
      %v2188 = vld [vmem:[%s1952 + $0x99] sm:$0xff]
      %v2189 = vld [vmem:[%s1952 + $0xa9] sm:$0xff]
      %v2190 = vld [vmem:[%s1952 + $0xb1] sm:$0xff]
      %v2191 = vld [vmem:[%s1952 + $0xc1] sm:$0xff]
      %v2192 = vld [vmem:[%s1952 + $0xc9] sm:$0xff]
      %v2193 = vld [vmem:[%s1952 + $0xd9] sm:$0xff]
      %v2194 = vld [vmem:[%s1952 + $0xe1] sm:$0xff]
      %v2195 = vld [vmem:[%s1952 + $0xf1] sm:$0xff]
      %v2196 = vld [vmem:[%s1952 + $0xf9] sm:$0xff]
      %v2197 = vld [vmem:[%s1952 + $0x109] sm:$0xff]
      %v2198 = vld [vmem:[%s1952 + $0x111] sm:$0xff]
      %v2199 = vld [vmem:[%s1952 + $0x121] sm:$0xff]
      %v2200 = vld [vmem:[%s1952 + $0x129] sm:$0xff]
      %v2201 = vld [vmem:[%s1952 + $0x139] sm:$0xff]
      %v2202 = vld [vmem:[%s1952 + $0x141] sm:$0xff]
      %v2203 = vld [vmem:[%s1952 + $0x151] sm:$0xff]
      %v2204 = vld [vmem:[%s1952 + $0x159] sm:$0xff]
      %v2205 = vld [vmem:[%s1952 + $0x169] sm:$0xff]
      %v2206 = vld [vmem:[%s1952 + $0x171] sm:$0xff]
      %v2207 = vpack.c.bf16 %v2176, %v2175
      %v2208 = vpack.c.bf16 %v2178, %v2177
      %v2209 = vpack.c.bf16 %v2180, %v2179
      %v2210 = vpack.c.bf16 %v2182, %v2181
      %v2211 = vpack.c.bf16 %v2184, %v2183
      %v2212 = vpack.c.bf16 %v2186, %v2185
      %v2213 = vpack.c.bf16 %v2188, %v2187
      %v2214 = vpack.c.bf16 %v2190, %v2189
      %v2215 = vpack.c.bf16 %v2192, %v2191
      %v2216 = vpack.c.bf16 %v2194, %v2193
      %v2217 = vpack.c.bf16 %v2196, %v2195
      %v2218 = vpack.c.bf16 %v2198, %v2197
      %v2219 = vpack.c.bf16 %v2200, %v2199
      %v2220 = vpack.c.bf16 %v2202, %v2201
      %v2221 = vpack.c.bf16 %v2204, %v2203
      %v2222 = vpack.c.bf16 %v2206, %v2205
      %s2223 = scalar_lea.vmem %s5, 28
      %v2224 = vld [vmem:[%s2223] sm:$0xf]
      %v2226 = vsel %vm651, %v2207, 0
      %v2229 = vsel %vm651, %v2208, 0
      %v2232 = vsel %vm651, %v2209, 0
      %v2235 = vsel %vm651, %v2210, 0
      %v2238 = vsel %vm651, %v2211, 0
      %v2241 = vsel %vm651, %v2212, 0
      %v2244 = vsel %vm651, %v2213, 0
      %v2247 = vsel %vm651, %v2214, 0
      %v2250 = vsel %vm651, %v2215, 0
      %v2253 = vsel %vm651, %v2216, 0
      %v2256 = vsel %vm651, %v2217, 0
      %v2259 = vsel %vm651, %v2218, 0
      %v2262 = vsel %vm651, %v2219, 0
      %v2265 = vsel %vm651, %v2220, 0
      %v2268 = vsel %vm651, %v2221, 0
      %v2271 = vsel %vm651, %v2222, 0
      %v2274 = vsel %vm831, %v2224, 0
      %2276 = vmatpush.bf16.msra.mxu0 0
      %2277 = vmatpush.bf16.msra.mxu0 0
      %2278 = vmatpush.bf16.msra.mxu0 0
      %2279 = vmatpush.bf16.msra.mxu0 0
      %2280 = vmatpush.bf16.msra.mxu0 0
      %2281 = vmatpush.bf16.msra.mxu0 0
      %2282 = vmatpush.bf16.msra.mxu0 0
      %2283 = vmatpush.bf16.msra.mxu0 %v2274
      %2284 = vmatmul.bf16.gmra.mxu0 %v2226
      %v2285 = vpop.f32.mrf.mxu0
      %v2286 = vadd.f32 0.0, %v2285
      %v2287 = vpop.f32.mrf.mxu0
      %v2288 = vadd.f32 0.0, %v2287
      %2289 = vmatmul.bf16.gmra.mxu0 %v2229
      %v2290 = vpop.f32.mrf.mxu0
      %v2291 = vadd.f32 0.0, %v2290
      %v2292 = vpop.f32.mrf.mxu0
      %v2293 = vadd.f32 0.0, %v2292
      %2294 = vmatmul.bf16.gmra.mxu0 %v2232
      %v2295 = vpop.f32.mrf.mxu0
      %v2296 = vadd.f32 0.0, %v2295
      %v2297 = vpop.f32.mrf.mxu0
      %v2298 = vadd.f32 0.0, %v2297
      %2299 = vmatmul.bf16.gmra.mxu0 %v2235
      %v2300 = vpop.f32.mrf.mxu0
      %v2301 = vadd.f32 0.0, %v2300
      %v2302 = vpop.f32.mrf.mxu0
      %v2303 = vadd.f32 0.0, %v2302
      %2304 = vmatmul.bf16.gmra.mxu0 %v2238
      %v2305 = vpop.f32.mrf.mxu0
      %v2306 = vadd.f32 0.0, %v2305
      %v2307 = vpop.f32.mrf.mxu0
      %v2308 = vadd.f32 0.0, %v2307
      %2309 = vmatmul.bf16.gmra.mxu0 %v2241
      %v2310 = vpop.f32.mrf.mxu0
      %v2311 = vadd.f32 0.0, %v2310
      %v2312 = vpop.f32.mrf.mxu0
      %v2313 = vadd.f32 0.0, %v2312
      %2314 = vmatmul.bf16.gmra.mxu0 %v2244
      %v2315 = vpop.f32.mrf.mxu0
      %v2316 = vadd.f32 0.0, %v2315
      %v2317 = vpop.f32.mrf.mxu0
      %v2318 = vadd.f32 0.0, %v2317
      %2319 = vmatmul.bf16.gmra.mxu0 %v2247
      %v2320 = vpop.f32.mrf.mxu0
      %v2321 = vadd.f32 0.0, %v2320
      %v2322 = vpop.f32.mrf.mxu0
      %v2323 = vadd.f32 0.0, %v2322
      %2324 = vmatmul.bf16.gmra.mxu0 %v2250
      %v2325 = vpop.f32.mrf.mxu0
      %v2326 = vadd.f32 0.0, %v2325
      %v2327 = vpop.f32.mrf.mxu0
      %v2328 = vadd.f32 0.0, %v2327
      %2329 = vmatmul.bf16.gmra.mxu0 %v2253
      %v2330 = vpop.f32.mrf.mxu0
      %v2331 = vadd.f32 0.0, %v2330
      %v2332 = vpop.f32.mrf.mxu0
      %v2333 = vadd.f32 0.0, %v2332
      %2334 = vmatmul.bf16.gmra.mxu0 %v2256
      %v2335 = vpop.f32.mrf.mxu0
      %v2336 = vadd.f32 0.0, %v2335
      %v2337 = vpop.f32.mrf.mxu0
      %v2338 = vadd.f32 0.0, %v2337
      %2339 = vmatmul.bf16.gmra.mxu0 %v2259
      %v2340 = vpop.f32.mrf.mxu0
      %v2341 = vadd.f32 0.0, %v2340
      %v2342 = vpop.f32.mrf.mxu0
      %v2343 = vadd.f32 0.0, %v2342
      %2344 = vmatmul.bf16.gmra.mxu0 %v2262
      %v2345 = vpop.f32.mrf.mxu0
      %v2346 = vadd.f32 0.0, %v2345
      %v2347 = vpop.f32.mrf.mxu0
      %v2348 = vadd.f32 0.0, %v2347
      %2349 = vmatmul.bf16.gmra.mxu0 %v2265
      %v2350 = vpop.f32.mrf.mxu0
      %v2351 = vadd.f32 0.0, %v2350
      %v2352 = vpop.f32.mrf.mxu0
      %v2353 = vadd.f32 0.0, %v2352
      %2354 = vmatmul.bf16.gmra.mxu0 %v2268
      %v2355 = vpop.f32.mrf.mxu0
      %v2356 = vadd.f32 0.0, %v2355
      %v2357 = vpop.f32.mrf.mxu0
      %v2358 = vadd.f32 0.0, %v2357
      %2359 = vmatmul.bf16.gmra.mxu0 %v2271
      %v2360 = vpop.f32.mrf.mxu0
      %v2361 = vadd.f32 0.0, %v2360
      %v2362 = vpop.f32.mrf.mxu0
      %v2363 = vadd.f32 0.0, %v2362
      %2364 = vdwg.mxu0
      %v2365 = vadd.f32 %v2143, %v2286
      %v2366 = vadd.f32 %v2144, %v2288
      %v2367 = vadd.f32 %v2145, %v2291
      %v2368 = vadd.f32 %v2146, %v2293
      %v2369 = vadd.f32 %v2147, %v2296
      %v2370 = vadd.f32 %v2148, %v2298
      %v2371 = vadd.f32 %v2149, %v2301
      %v2372 = vadd.f32 %v2150, %v2303
      %v2373 = vadd.f32 %v2151, %v2306
      %v2374 = vadd.f32 %v2152, %v2308
      %v2375 = vadd.f32 %v2153, %v2311
      %v2376 = vadd.f32 %v2154, %v2313
      %v2377 = vadd.f32 %v2155, %v2316
      %v2378 = vadd.f32 %v2156, %v2318
      %v2379 = vadd.f32 %v2157, %v2321
      %v2380 = vadd.f32 %v2158, %v2323
      %v2381 = vadd.f32 %v2159, %v2326
      %v2382 = vadd.f32 %v2160, %v2328
      %v2383 = vadd.f32 %v2161, %v2331
      %v2384 = vadd.f32 %v2162, %v2333
      %v2385 = vadd.f32 %v2163, %v2336
      %v2386 = vadd.f32 %v2164, %v2338
      %v2387 = vadd.f32 %v2165, %v2341
      %v2388 = vadd.f32 %v2166, %v2343
      %v2389 = vadd.f32 %v2167, %v2346
      %v2390 = vadd.f32 %v2168, %v2348
      %v2391 = vadd.f32 %v2169, %v2351
      %v2392 = vadd.f32 %v2170, %v2353
      %v2393 = vadd.f32 %v2171, %v2356
      %v2394 = vadd.f32 %v2172, %v2358
      %v2395 = vadd.f32 %v2173, %v2361
      %v2396 = vadd.f32 %v2174, %v2363
      %v2397 = vld [vmem:[%s1952 + $0x2] sm:$0xff]
      %v2398 = vld [vmem:[%s1952 + $0xa] sm:$0xff]
      %v2399 = vld [vmem:[%s1952 + $0x1a] sm:$0xff]
      %v2400 = vld [vmem:[%s1952 + $0x22] sm:$0xff]
      %v2401 = vld [vmem:[%s1952 + $0x32] sm:$0xff]
      %v2402 = vld [vmem:[%s1952 + $0x3a] sm:$0xff]
      %v2403 = vld [vmem:[%s1952 + $0x4a] sm:$0xff]
      %v2404 = vld [vmem:[%s1952 + $0x52] sm:$0xff]
      %v2405 = vld [vmem:[%s1952 + $0x62] sm:$0xff]
      %v2406 = vld [vmem:[%s1952 + $0x6a] sm:$0xff]
      %v2407 = vld [vmem:[%s1952 + $0x7a] sm:$0xff]
      %v2408 = vld [vmem:[%s1952 + $0x82] sm:$0xff]
      %v2409 = vld [vmem:[%s1952 + $0x92] sm:$0xff]
      %v2410 = vld [vmem:[%s1952 + $0x9a] sm:$0xff]
      %v2411 = vld [vmem:[%s1952 + $0xaa] sm:$0xff]
      %v2412 = vld [vmem:[%s1952 + $0xb2] sm:$0xff]
      %v2413 = vld [vmem:[%s1952 + $0xc2] sm:$0xff]
      %v2414 = vld [vmem:[%s1952 + $0xca] sm:$0xff]
      %v2415 = vld [vmem:[%s1952 + $0xda] sm:$0xff]
      %v2416 = vld [vmem:[%s1952 + $0xe2] sm:$0xff]
      %v2417 = vld [vmem:[%s1952 + $0xf2] sm:$0xff]
      %v2418 = vld [vmem:[%s1952 + $0xfa] sm:$0xff]
      %v2419 = vld [vmem:[%s1952 + $0x10a] sm:$0xff]
      %v2420 = vld [vmem:[%s1952 + $0x112] sm:$0xff]
      %v2421 = vld [vmem:[%s1952 + $0x122] sm:$0xff]
      %v2422 = vld [vmem:[%s1952 + $0x12a] sm:$0xff]
      %v2423 = vld [vmem:[%s1952 + $0x13a] sm:$0xff]
      %v2424 = vld [vmem:[%s1952 + $0x142] sm:$0xff]
      %v2425 = vld [vmem:[%s1952 + $0x152] sm:$0xff]
      %v2426 = vld [vmem:[%s1952 + $0x15a] sm:$0xff]
      %v2427 = vld [vmem:[%s1952 + $0x16a] sm:$0xff]
      %v2428 = vld [vmem:[%s1952 + $0x172] sm:$0xff]
      %v2429 = vpack.c.bf16 %v2398, %v2397
      %v2430 = vpack.c.bf16 %v2400, %v2399
      %v2431 = vpack.c.bf16 %v2402, %v2401
      %v2432 = vpack.c.bf16 %v2404, %v2403
      %v2433 = vpack.c.bf16 %v2406, %v2405
      %v2434 = vpack.c.bf16 %v2408, %v2407
      %v2435 = vpack.c.bf16 %v2410, %v2409
      %v2436 = vpack.c.bf16 %v2412, %v2411
      %v2437 = vpack.c.bf16 %v2414, %v2413
      %v2438 = vpack.c.bf16 %v2416, %v2415
      %v2439 = vpack.c.bf16 %v2418, %v2417
      %v2440 = vpack.c.bf16 %v2420, %v2419
      %v2441 = vpack.c.bf16 %v2422, %v2421
      %v2442 = vpack.c.bf16 %v2424, %v2423
      %v2443 = vpack.c.bf16 %v2426, %v2425
      %v2444 = vpack.c.bf16 %v2428, %v2427
      %s2445 = scalar_lea.vmem %s5, 32
      %v2446 = vld [vmem:[%s2445] sm:$0xf]
      %v2448 = vsel %vm651, %v2429, 0
      %v2451 = vsel %vm651, %v2430, 0
      %v2454 = vsel %vm651, %v2431, 0
      %v2457 = vsel %vm651, %v2432, 0
      %v2460 = vsel %vm651, %v2433, 0
      %v2463 = vsel %vm651, %v2434, 0
      %v2466 = vsel %vm651, %v2435, 0
      %v2469 = vsel %vm651, %v2436, 0
      %v2472 = vsel %vm651, %v2437, 0
      %v2475 = vsel %vm651, %v2438, 0
      %v2478 = vsel %vm651, %v2439, 0
      %v2481 = vsel %vm651, %v2440, 0
      %v2484 = vsel %vm651, %v2441, 0
      %v2487 = vsel %vm651, %v2442, 0
      %v2490 = vsel %vm651, %v2443, 0
      %v2493 = vsel %vm651, %v2444, 0
      %v2496 = vsel %vm831, %v2446, 0
      %2498 = vmatpush.bf16.msra.mxu0 0
      %2499 = vmatpush.bf16.msra.mxu0 0
      %2500 = vmatpush.bf16.msra.mxu0 0
      %2501 = vmatpush.bf16.msra.mxu0 0
      %2502 = vmatpush.bf16.msra.mxu0 0
      %2503 = vmatpush.bf16.msra.mxu0 0
      %2504 = vmatpush.bf16.msra.mxu0 0
      %2505 = vmatpush.bf16.msra.mxu0 %v2496
      %2506 = vmatmul.bf16.gmra.mxu0 %v2448
      %v2507 = vpop.f32.mrf.mxu0
      %v2508 = vadd.f32 0.0, %v2507
      %v2509 = vpop.f32.mrf.mxu0
      %v2510 = vadd.f32 0.0, %v2509
      %2511 = vmatmul.bf16.gmra.mxu0 %v2451
      %v2512 = vpop.f32.mrf.mxu0
      %v2513 = vadd.f32 0.0, %v2512
      %v2514 = vpop.f32.mrf.mxu0
      %v2515 = vadd.f32 0.0, %v2514
      %2516 = vmatmul.bf16.gmra.mxu0 %v2454
      %v2517 = vpop.f32.mrf.mxu0
      %v2518 = vadd.f32 0.0, %v2517
      %v2519 = vpop.f32.mrf.mxu0
      %v2520 = vadd.f32 0.0, %v2519
      %2521 = vmatmul.bf16.gmra.mxu0 %v2457
      %v2522 = vpop.f32.mrf.mxu0
      %v2523 = vadd.f32 0.0, %v2522
      %v2524 = vpop.f32.mrf.mxu0
      %v2525 = vadd.f32 0.0, %v2524
      %2526 = vmatmul.bf16.gmra.mxu0 %v2460
      %v2527 = vpop.f32.mrf.mxu0
      %v2528 = vadd.f32 0.0, %v2527
      %v2529 = vpop.f32.mrf.mxu0
      %v2530 = vadd.f32 0.0, %v2529
      %2531 = vmatmul.bf16.gmra.mxu0 %v2463
      %v2532 = vpop.f32.mrf.mxu0
      %v2533 = vadd.f32 0.0, %v2532
      %v2534 = vpop.f32.mrf.mxu0
      %v2535 = vadd.f32 0.0, %v2534
      %2536 = vmatmul.bf16.gmra.mxu0 %v2466
      %v2537 = vpop.f32.mrf.mxu0
      %v2538 = vadd.f32 0.0, %v2537
      %v2539 = vpop.f32.mrf.mxu0
      %v2540 = vadd.f32 0.0, %v2539
      %2541 = vmatmul.bf16.gmra.mxu0 %v2469
      %v2542 = vpop.f32.mrf.mxu0
      %v2543 = vadd.f32 0.0, %v2542
      %v2544 = vpop.f32.mrf.mxu0
      %v2545 = vadd.f32 0.0, %v2544
      %2546 = vmatmul.bf16.gmra.mxu0 %v2472
      %v2547 = vpop.f32.mrf.mxu0
      %v2548 = vadd.f32 0.0, %v2547
      %v2549 = vpop.f32.mrf.mxu0
      %v2550 = vadd.f32 0.0, %v2549
      %2551 = vmatmul.bf16.gmra.mxu0 %v2475
      %v2552 = vpop.f32.mrf.mxu0
      %v2553 = vadd.f32 0.0, %v2552
      %v2554 = vpop.f32.mrf.mxu0
      %v2555 = vadd.f32 0.0, %v2554
      %2556 = vmatmul.bf16.gmra.mxu0 %v2478
      %v2557 = vpop.f32.mrf.mxu0
      %v2558 = vadd.f32 0.0, %v2557
      %v2559 = vpop.f32.mrf.mxu0
      %v2560 = vadd.f32 0.0, %v2559
      %2561 = vmatmul.bf16.gmra.mxu0 %v2481
      %v2562 = vpop.f32.mrf.mxu0
      %v2563 = vadd.f32 0.0, %v2562
      %v2564 = vpop.f32.mrf.mxu0
      %v2565 = vadd.f32 0.0, %v2564
      %2566 = vmatmul.bf16.gmra.mxu0 %v2484
      %v2567 = vpop.f32.mrf.mxu0
      %v2568 = vadd.f32 0.0, %v2567
      %v2569 = vpop.f32.mrf.mxu0
      %v2570 = vadd.f32 0.0, %v2569
      %2571 = vmatmul.bf16.gmra.mxu0 %v2487
      %v2572 = vpop.f32.mrf.mxu0
      %v2573 = vadd.f32 0.0, %v2572
      %v2574 = vpop.f32.mrf.mxu0
      %v2575 = vadd.f32 0.0, %v2574
      %2576 = vmatmul.bf16.gmra.mxu0 %v2490
      %v2577 = vpop.f32.mrf.mxu0
      %v2578 = vadd.f32 0.0, %v2577
      %v2579 = vpop.f32.mrf.mxu0
      %v2580 = vadd.f32 0.0, %v2579
      %2581 = vmatmul.bf16.gmra.mxu0 %v2493
      %v2582 = vpop.f32.mrf.mxu0
      %v2583 = vadd.f32 0.0, %v2582
      %v2584 = vpop.f32.mrf.mxu0
      %v2585 = vadd.f32 0.0, %v2584
      %2586 = vdwg.mxu0
      %v2587 = vadd.f32 %v2365, %v2508
      %v2588 = vadd.f32 %v2366, %v2510
      %v2589 = vadd.f32 %v2367, %v2513
      %v2590 = vadd.f32 %v2368, %v2515
      %v2591 = vadd.f32 %v2369, %v2518
      %v2592 = vadd.f32 %v2370, %v2520
      %v2593 = vadd.f32 %v2371, %v2523
      %v2594 = vadd.f32 %v2372, %v2525
      %v2595 = vadd.f32 %v2373, %v2528
      %v2596 = vadd.f32 %v2374, %v2530
      %v2597 = vadd.f32 %v2375, %v2533
      %v2598 = vadd.f32 %v2376, %v2535
      %v2599 = vadd.f32 %v2377, %v2538
      %v2600 = vadd.f32 %v2378, %v2540
      %v2601 = vadd.f32 %v2379, %v2543
      %v2602 = vadd.f32 %v2380, %v2545
      %v2603 = vadd.f32 %v2381, %v2548
      %v2604 = vadd.f32 %v2382, %v2550
      %v2605 = vadd.f32 %v2383, %v2553
      %v2606 = vadd.f32 %v2384, %v2555
      %v2607 = vadd.f32 %v2385, %v2558
      %v2608 = vadd.f32 %v2386, %v2560
      %v2609 = vadd.f32 %v2387, %v2563
      %v2610 = vadd.f32 %v2388, %v2565
      %v2611 = vadd.f32 %v2389, %v2568
      %v2612 = vadd.f32 %v2390, %v2570
      %v2613 = vadd.f32 %v2391, %v2573
      %v2614 = vadd.f32 %v2392, %v2575
      %v2615 = vadd.f32 %v2393, %v2578
      %v2616 = vadd.f32 %v2394, %v2580
      %v2617 = vadd.f32 %v2395, %v2583
      %v2618 = vadd.f32 %v2396, %v2585
      %vm2619 = vcmask 31744
      %2620 = vst.msk [vmem:[%s251] sm:$0xff] %vm2619, %v2587
      %2621 = vst.msk [vmem:[%s251 + $0x8] sm:$0xff] %vm2619, %v2588
      %2622 = vst.msk [vmem:[%s251 + $0x10] sm:$0xff] %vm2619, %v2589
      %2623 = vst.msk [vmem:[%s251 + $0x18] sm:$0xff] %vm2619, %v2590
      %2624 = vst.msk [vmem:[%s251 + $0x20] sm:$0xff] %vm2619, %v2591
      %2625 = vst.msk [vmem:[%s251 + $0x28] sm:$0xff] %vm2619, %v2592
      %2626 = vst.msk [vmem:[%s251 + $0x30] sm:$0xff] %vm2619, %v2593
      %2627 = vst.msk [vmem:[%s251 + $0x38] sm:$0xff] %vm2619, %v2594
      %2628 = vst.msk [vmem:[%s251 + $0x40] sm:$0xff] %vm2619, %v2595
      %2629 = vst.msk [vmem:[%s251 + $0x48] sm:$0xff] %vm2619, %v2596
      %2630 = vst.msk [vmem:[%s251 + $0x50] sm:$0xff] %vm2619, %v2597
      %2631 = vst.msk [vmem:[%s251 + $0x58] sm:$0xff] %vm2619, %v2598
      %2632 = vst.msk [vmem:[%s251 + $0x60] sm:$0xff] %vm2619, %v2599
      %2633 = vst.msk [vmem:[%s251 + $0x68] sm:$0xff] %vm2619, %v2600
      %2634 = vst.msk [vmem:[%s251 + $0x70] sm:$0xff] %vm2619, %v2601
      %2635 = vst.msk [vmem:[%s251 + $0x78] sm:$0xff] %vm2619, %v2602
      %2636 = vst.msk [vmem:[%s251 + $0x80] sm:$0xff] %vm2619, %v2603
      %2637 = vst.msk [vmem:[%s251 + $0x88] sm:$0xff] %vm2619, %v2604
      %2638 = vst.msk [vmem:[%s251 + $0x90] sm:$0xff] %vm2619, %v2605
      %2639 = vst.msk [vmem:[%s251 + $0x98] sm:$0xff] %vm2619, %v2606
      %2640 = vst.msk [vmem:[%s251 + $0xa0] sm:$0xff] %vm2619, %v2607
      %2641 = vst.msk [vmem:[%s251 + $0xa8] sm:$0xff] %vm2619, %v2608
      %2642 = vst.msk [vmem:[%s251 + $0xb0] sm:$0xff] %vm2619, %v2609
      %2643 = vst.msk [vmem:[%s251 + $0xb8] sm:$0xff] %vm2619, %v2610
      %2644 = vst.msk [vmem:[%s251 + $0xc0] sm:$0xff] %vm2619, %v2611
      %2645 = vst.msk [vmem:[%s251 + $0xc8] sm:$0xff] %vm2619, %v2612
      %2646 = vst.msk [vmem:[%s251 + $0xd0] sm:$0xff] %vm2619, %v2613
      %2647 = vst.msk [vmem:[%s251 + $0xd8] sm:$0xff] %vm2619, %v2614
      %2648 = vst.msk [vmem:[%s251 + $0xe0] sm:$0xff] %vm2619, %v2615
      %2649 = vst.msk [vmem:[%s251 + $0xe8] sm:$0xff] %vm2619, %v2616
      %2650 = vst.msk [vmem:[%s251 + $0xf0] sm:$0xff] %vm2619, %v2617
      %2651 = vst.msk [vmem:[%s251 + $0xf8] sm:$0xff] %vm2619, %v2618
      %p2652 = scmp.lt.s32.totalorder %s17, 1
      %s2653 = scalar_select %p2652, %s17, 1
      %s2654 = smul.addr %s2653, 32
      %s2655 = smul.addr %s2654, 8
      %s2656 = scalar_lea.vmem %s6, %s2655
      // Predicated region
      $region49: #{dense_block_forward.2} parent=43 // pred_check
        %p2657 = pneg %p166
      $region50: #{dense_block_forward.2} parent=43 // pred_check_branch
        %2659 = sbr.rel (%p2657) target = $region52
      $region51: #{dense_block_forward.2} parent=43 // pred_region
        _
      $region52: #{dense_block_forward.2} parent=43 // pred_fallthru
        _
    $region44: #{dense_block_forward.2} parent=5 // pred_fallthru
      _
    %p2660 = scmp.le.s32.totalorder 2, %s12
    // Predicated region
    $region53: #{dense_block_forward.2} parent=5 // pred_check
      %p2661 = pneg %p2660
    $region54: #{dense_block_forward.2} parent=5 // pred_check_branch
      %2663 = sbr.rel (%p2661) target = $region56
    $region55: #{dense_block_forward.2} parent=5 // pred_region
      %s2664 = ssub.s32 %s12, 2
      // Predicated region
      $region57: #{dense_block_forward.2} parent=55 // pred_check
        %p2665 = pneg %p172
      $region58: #{dense_block_forward.2} parent=55 // pred_check_branch
        %2667 = sbr.rel (%p2665) target = $region60
      $region59: #{dense_block_forward.2} parent=55 // pred_region
        %p2668 = scmp.lt.s32.totalorder %s18, 1
        %s2669 = scalar_select %p2668, %s18, 1
        %s2670 = smul.addr %s2669, 32
        %s2671 = smul.addr %s2670, 8
        %s2672 = scalar_lea.vmem %s6, %s2671
      $region60: #{dense_block_forward.2} parent=55 // pred_fallthru
        _
    $region56: #{dense_block_forward.2} parent=5 // pred_fallthru
      _
  $region6: #{dense_block_forward.2} parent=0 // loop_footer
    %s16 = sadd.s32 1, %s12
  $region7: #{dense_block_forward.2} parent=0 // loop_footer_branch
    %11 = sbr.rel target = $region3
  $region8: #{dense_block_forward.2} parent=0 // loop_exit
    _

</llo_original>
